<compile_context>
chip_gen: v7x
topology: tpu7x:2x2x1
jax: 0.10.0
libtpu: 0.0.40
codegen_flags: <defaults>
</compile_context>

<pallas_src>
import math

import jax
import jax.numpy as jnp
from jax.experimental import pallas as pl
from jax.experimental.pallas import tpu as pltpu

_EPS = 1e-5
_SLOPE = 0.01


def _round_up(n, m):
    return ((n + m - 1) // m) * m


def _pad2(a, rows, cols):
    return jnp.pad(a, ((0, rows - a.shape[0]), (0, cols - a.shape[1])))


# ---------------------------------------------------------------------------
# One-time weight preprocessing (run once, reuse for every forward call).
# ---------------------------------------------------------------------------
def prepare_params(params, original_features_num, in_features_num, num_classes,
                   compute_dtype=jnp.bfloat16):
    O, F, C = original_features_num, in_features_num, num_classes
    Op, Fp = _round_up(O, 128), _round_up(F, 128)
    F2p, F4p = _round_up(2 * F, 128), _round_up(4 * F, 128)
    Cp = _round_up(C, 128)

    def w(name, rows, cols):           # matmul weights: pad + cast to bf16 once
        return _pad2(params[name], rows, cols).astype(compute_dtype)

    def v(name, cols):                 # gamma / beta / kept biases stay f32
        return _pad2(params[name].reshape(1, -1), 1, cols).astype(jnp.float32)

    # classifier weight laid out for the lane-concatenated [x1f | x2f] input
    w_fc = params["w_fc"]
    w_fc_cat = jnp.concatenate(
        [_pad2(w_fc[: 4 * F], F4p, Cp), _pad2(w_fc[4 * F:], F4p, Cp)],
        axis=0).astype(compute_dtype)

    # NOTE: biases of layers feeding a BatchNorm (fe, f1, f2, d1, d2) cancel
    # exactly under training-mode BN and are intentionally not included.
    prep = {
        "w_fe": w("w_fe", Op, Fp), "g_fe": v("g_fe", Fp), "be_fe": v("be_fe", Fp),
        "w_f1": w("w_f1", Fp, F2p), "g_f1": v("g_f1", F2p), "be_f1": v("be_f1", F2p),
        "w_f2": w("w_f2", F2p, F4p), "g_f2": v("g_f2", F4p), "be_f2": v("be_f2", F4p),
        "w_d1": w("w_d1", F4p, F2p), "g_d1": v("g_d1", F2p), "be_d1": v("be_d1", F2p),
        "w_d2": w("w_d2", F2p, Fp), "g_d2": v("g_d2", Fp), "be_d2": v("be_d2", Fp),
        "w_df": w("w_df", Fp, Op), "b_df": v("b_df", Op),
        "w_fc": w_fc_cat, "b_fc": v("b_fc", Cp),
    }
    meta = dict(O=O, F=F, C=C, Op=Op, Fp=Fp, F2p=F2p, F4p=F4p, Cp=Cp,
                compute_dtype=compute_dtype)
    return prep, meta


# ---------------------------------------------------------------------------
# Forward wrapper + fused kernel.
# ---------------------------------------------------------------------------
def regressor_combine_forward(x1, x2, prep, meta):
    O, F, C = meta["O"], meta["F"], meta["C"]
    Op, Fp, F4p, Cp = meta["Op"], meta["Fp"], meta["F4p"], meta["Cp"]
    cdt = meta["compute_dtype"]

    B = x1.shape[0]
    Bp = _round_up(B, 8)
    apply_mask = (Bp != B)
    inv_n = 1.0 / float(B)

    # only the two activations are padded per call; weights are pre-padded
    x1_p = _pad2(x1.astype(jnp.float32), Bp, Op)
    x2_p = _pad2(x2.astype(jnp.float32), Bp, Fp)

    weight_args = (
        prep["w_fe"], prep["g_fe"], prep["be_fe"],
        prep["w_f1"], prep["g_f1"], prep["be_f1"],
        prep["w_f2"], prep["g_f2"], prep["be_f2"],
        prep["w_d1"], prep["g_d1"], prep["be_d1"],
        prep["w_d2"], prep["g_d2"], prep["be_d2"],
        prep["w_df"], prep["b_df"],
        prep["w_fc"], prep["b_fc"],
    )
    if apply_mask:
        row_mask = (jnp.arange(Bp) < B).astype(jnp.float32).reshape(Bp, 1)
        args = (x1_p, x2_p, row_mask) + weight_args
    else:
        args = (x1_p, x2_p) + weight_args

    def kernel(*refs):
        it = iter(refs)
        x1_ref, x2_ref = next(it), next(it)
        mask_ref = next(it) if apply_mask else None
        (w_fe, g_fe, be_fe,
         w_f1, g_f1, be_f1,
         w_f2, g_f2, be_f2,
         w_d1, g_d1, be_d1,
         w_d2, g_d2, be_d2,
         w_df, b_df,
         w_fc, b_fc,
         x1_out, x2_out, logits_out, rec_out) = tuple(it)

        mask = mask_ref[...] if apply_mask else None

        def mm(x_bf, w_ref):
            # bf16 operands, f32 accumulation on the MXU
            return jnp.dot(x_bf, w_ref[...], preferred_element_type=jnp.float32)

        def lrelu(h):
            return jnp.maximum(h, _SLOPE * h)

        def bn(h, g_ref, be_ref):
            # training-mode BatchNorm1d: batch mean, biased two-pass variance
            hm = h * mask if apply_mask else h
            mu = jnp.sum(hm, axis=0, keepdims=True) * inv_n
            d = h - mu
            dm = d * mask if apply_mask else d
            var = jnp.sum(dm * dm, axis=0, keepdims=True) * inv_n
            s = g_ref[...] * jax.lax.rsqrt(var + _EPS)   # per-feature scale
            t = be_ref[...] - mu * s                     # per-feature shift
            return h * s + t

        def bn_stacked(h, g_ref, be_ref):
            # rows [0:Bp] = x1 path, rows [Bp:2Bp] = x2 path: shared affine
            # parameters but separate batch statistics per half.
            return jnp.concatenate(
                [bn(h[:Bp], g_ref, be_ref), bn(h[Bp:], g_ref, be_ref)], axis=0)

        # ---- x1 path: feature_extractor -> bn_fe (no activation) -----------
        h1 = bn(mm(x1_ref[...].astype(cdt), w_fe), g_fe, be_fe)

        # ---- shared fcn_f on stacked [h1 ; x2]: one weight push per layer --
        stacked = jnp.concatenate([h1, x2_ref[...]], axis=0)        # (2Bp, Fp)
        h = lrelu(bn_stacked(mm(stacked.astype(cdt), w_f1), g_f1, be_f1))
        feat = lrelu(bn_stacked(mm(h.astype(cdt), w_f2), g_f2, be_f2))

        x1f = feat[:Bp]
        x2f = feat[Bp:]
        x1_out[...] = x1f
        x2_out[...] = x2f

        x1f_bf = x1f.astype(cdt)   # cast once; reused by decoder + classifier
        x2f_bf = x2f.astype(cdt)

        # ---- decoder(x1f) ---------------------------------------------------
        hd = lrelu(bn(mm(x1f_bf, w_d1), g_d1, be_d1))
        hd = lrelu(bn(mm(hd.astype(cdt), w_d2), g_d2, be_d2))
        rec_out[...] = mm(hd.astype(cdt), w_df) + b_df[...]

        # ---- classifier: single full-depth matmul on concat(x1f, x2f) ------
        cat = jnp.concatenate([x1f_bf, x2f_bf], axis=1)           # (Bp, 2*F4p)
        logits_out[...] = mm(cat, w_fc) + b_fc[...]

    out_shapes = (
        jax.ShapeDtypeStruct((Bp, F4p), jnp.float32),   # x1 features
        jax.ShapeDtypeStruct((Bp, F4p), jnp.float32),   # x2 features
        jax.ShapeDtypeStruct((Bp, Cp), jnp.float32),    # logits
        jax.ShapeDtypeStruct((Bp, Op), jnp.float32),    # x1 reconstruction
    )

    def full_spec(shape):
        zeros = (0,) * len(shape)
        return pl.BlockSpec(shape, lambda *_: zeros)

    # resident footprint (no double buffering at grid=()) + headroom,
    # kept well below the v7x 64 MiB per-TC cap
    nbytes = sum(int(a.size) * a.dtype.itemsize for a in args)
    nbytes += sum(math.prod(s.shape) * jnp.dtype(s.dtype).itemsize
                  for s in out_shapes)
    vmem_limit = int(min(56 * 2**20, max(16 * 2**20, nbytes + 8 * 2**20)))

    outs = pl.pallas_call(
        kernel,
        out_shape=out_shapes,
        grid_spec=pltpu.PrefetchScalarGridSpec(
            num_scalar_prefetch=0,
            grid=(),                                   # single fused invocation
            in_specs=[full_spec(a.shape) for a in args],
            out_specs=[full_spec(s.shape) for s in out_shapes],
        ),
        compiler_params=pltpu.CompilerParams(vmem_limit_bytes=vmem_limit),
    )(*args)

    x1f_p, x2f_p, logits_p, rec_p = outs
    return (x1f_p[:B, :4 * F], x2f_p[:B, :4 * F],
            logits_p[:B, :C], rec_p[:B, :O])


# ---------------------------------------------------------------------------
# Parameter init + pure-JAX reference (identical semantics, for verification).
# ---------------------------------------------------------------------------
def init_params(key, original_features_num, in_features_num, num_classes):
    O, F, C = original_features_num, in_features_num, num_classes
    keys = iter(jax.random.split(key, 24))

    def linear(fan_in, fan_out):   # nn.Linear weight stored transposed [in, out]
        w = jax.random.normal(next(keys), (fan_in, fan_out), jnp.float32) * 0.1
        b = jax.random.normal(next(keys), (fan_out,), jnp.float32) * 0.1
        return w, b

    def bnorm(n):                  # randomized affine to exercise gamma/beta
        g = 1.0 + 0.1 * jax.random.normal(next(keys), (n,), jnp.float32)
        b = 0.1 * jax.random.normal(next(keys), (n,), jnp.float32)
        return g, b

    p = {}
    p["w_fe"], p["b_fe"] = linear(O, F)          # feature_extractor
    p["g_fe"], p["be_fe"] = bnorm(F)             # bn_fe
    p["w_f1"], p["b_f1"] = linear(F, 2 * F)      # fcn_f.fc1
    p["g_f1"], p["be_f1"] = bnorm(2 * F)         # fcn_f.bn1
    p["w_f2"], p["b_f2"] = linear(2 * F, 4 * F)  # fcn_f.fc2
    p["g_f2"], p["be_f2"] = bnorm(4 * F)         # fcn_f.bn2
    p["w_d1"], p["b_d1"] = linear(4 * F, 2 * F)  # decoder.fc1
    p["g_d1"], p["be_d1"] = bnorm(2 * F)         # decoder.bn1
    p["w_d2"], p["b_d2"] = linear(2 * F, F)      # decoder.fc2
    p["g_d2"], p["be_d2"] = bnorm(F)             # decoder.bn2
    p["w_df"], p["b_df"] = linear(F, O)          # decoder.final_rec_layer
    p["w_fc"], p["b_fc"] = linear(8 * F, C)      # fc (classifier)
    return p


def reference_forward(x1, x2, p, compute_dtype=jnp.bfloat16):
    """Pure-JAX reference with full biases (bf16 matmuls, f32 training-mode BN)."""
    def lin(x, w, b):
        return jnp.dot(x.astype(compute_dtype), w.astype(compute_dtype),
                       preferred_element_type=jnp.float32) + b

    def bn(h, g, be):
        mu = jnp.mean(h, axis=0, keepdims=True)
        var = jnp.mean((h - mu) ** 2, axis=0, keepdims=True)
        return (h - mu) * jax.lax.rsqrt(var + _EPS) * g + be

    def lrelu(h):
        return jnp.maximum(h, _SLOPE * h)

    def fcn_f(x):
        h = lrelu(bn(lin(x, p["w_f1"], p["b_f1"]), p["g_f1"], p["be_f1"]))
        return lrelu(bn(lin(h, p["w_f2"], p["b_f2"]), p["g_f2"], p["be_f2"]))

    x1f = fcn_f(bn(lin(x1, p["w_fe"], p["b_fe"]), p["g_fe"], p["be_fe"]))
    hd = lrelu(bn(lin(x1f, p["w_d1"], p["b_d1"]), p["g_d1"], p["be_d1"]))
    hd = lrelu(bn(lin(hd, p["w_d2"], p["b_d2"]), p["g_d2"], p["be_d2"]))
    rec = lin(hd, p["w_df"], p["b_df"])
    x2f = fcn_f(x2)
    logits = lin(jnp.concatenate([x1f, x2f], axis=1), p["w_fc"], p["b_fc"])
    return x1f, x2f, logits, rec


if __name__ == "__main__":
    in_features_num = 32        # F
    original_features_num = 48  # O
    num_classes = 16            # C
    batch = 8

    key = jax.random.PRNGKey(0)
    k1, k2, kp = jax.random.split(key, 3)
    x1 = jax.random.normal(k1, (batch, original_features_num), jnp.float32)
    x2 = jax.random.normal(k2, (batch, in_features_num), jnp.float32)
    params = init_params(kp, original_features_num, in_features_num, num_classes)

    # one-time weight preprocessing (padding + bf16 casts hoisted out of forward)
    prep, meta = prepare_params(params, original_features_num,
                                in_features_num, num_classes)

    outs = regressor_combine_forward(x1, x2, prep, meta)
    outs = tuple(jax.block_until_ready(o) for o in outs)
    x1f, x2f, logits, x1_rec = outs

    assert x1f.shape == (batch, 4 * in_features_num)
    assert x2f.shape == (batch, 4 * in_features_num)
    assert logits.shape == (batch, num_classes)
    assert x1_rec.shape == (batch, original_features_num)

    refs = reference_forward(x1, x2, params)
    for got, ref in zip(outs, refs):
        err = float(jnp.max(jnp.abs(got - ref)))
        assert jnp.allclose(got, ref, atol=1e-2, rtol=1e-2), err

    print("KERNEL_OK")
</pallas_src>

<mosaic_0001>
module attributes {stable_mosaic.version = 11 : i64} {
  func.func @kernel(%arg0: memref<8x128xf32, #tpu.memory_space<vmem>>, %arg1: memref<8x128xf32, #tpu.memory_space<vmem>>, %arg2: memref<128x128xbf16, #tpu.memory_space<vmem>>, %arg3: memref<1x128xf32, #tpu.memory_space<vmem>>, %arg4: memref<1x128xf32, #tpu.memory_space<vmem>>, %arg5: memref<128x128xbf16, #tpu.memory_space<vmem>>, %arg6: memref<1x128xf32, #tpu.memory_space<vmem>>, %arg7: memref<1x128xf32, #tpu.memory_space<vmem>>, %arg8: memref<128x128xbf16, #tpu.memory_space<vmem>>, %arg9: memref<1x128xf32, #tpu.memory_space<vmem>>, %arg10: memref<1x128xf32, #tpu.memory_space<vmem>>, %arg11: memref<128x128xbf16, #tpu.memory_space<vmem>>, %arg12: memref<1x128xf32, #tpu.memory_space<vmem>>, %arg13: memref<1x128xf32, #tpu.memory_space<vmem>>, %arg14: memref<128x128xbf16, #tpu.memory_space<vmem>>, %arg15: memref<1x128xf32, #tpu.memory_space<vmem>>, %arg16: memref<1x128xf32, #tpu.memory_space<vmem>>, %arg17: memref<128x128xbf16, #tpu.memory_space<vmem>>, %arg18: memref<1x128xf32, #tpu.memory_space<vmem>>, %arg19: memref<256x128xbf16, #tpu.memory_space<vmem>>, %arg20: memref<1x128xf32, #tpu.memory_space<vmem>>, %arg21: memref<8x128xf32, #tpu.memory_space<vmem>>, %arg22: memref<8x128xf32, #tpu.memory_space<vmem>>, %arg23: memref<8x128xf32, #tpu.memory_space<vmem>>, %arg24: memref<8x128xf32, #tpu.memory_space<vmem>>) attributes {dimension_semantics = [], scalar_prefetch = 0 : i64, scratch_operands = 0 : i64, tpu.core_type = #tpu.core_type<tc>} {
    %c0 = arith.constant 0 : index
    %c0_0 = arith.constant 0 : index
    %0 = vector.load %arg0[%c0, %c0_0] : memref<8x128xf32, #tpu.memory_space<vmem>>, vector<8x128xf32>
    %1 = arith.truncf %0 : vector<8x128xf32> to vector<8x128xbf16>
    %c0_1 = arith.constant 0 : index
    %c0_2 = arith.constant 0 : index
    %2 = vector.load %arg2[%c0_1, %c0_2] : memref<128x128xbf16, #tpu.memory_space<vmem>>, vector<128x128xbf16>
    %cst = arith.constant dense<0.000000e+00> : vector<8x128xf32>
    %3 = tpu.matmul %1, %2, %cst {dimension_numbers = #tpu.dot_dimension_numbers<[1], [0], [0], [1], [0, 0, 1, 1], [], []>} : vector<8x128xbf16>, vector<128x128xbf16>, vector<8x128xf32> -> vector<8x128xf32>
    %cst_3 = arith.constant dense<0.000000e+00> : vector<128xf32>
    %4 = vector.multi_reduction <add>, %3, %cst_3 [0] : vector<8x128xf32> to vector<128xf32>
    %5 = vector.shape_cast %4 : vector<128xf32> to vector<1x128xf32>
    %cst_4 = arith.constant 1.250000e-01 : f32
    %6 = vector.broadcast %cst_4 : f32 to vector<1x128xf32>
    %7 = arith.mulf %5, %6 : vector<1x128xf32>
    %8 = vector.broadcast %7 : vector<1x128xf32> to vector<8x128xf32>
    %9 = arith.subf %3, %8 : vector<8x128xf32>
    %10 = arith.mulf %9, %9 : vector<8x128xf32>
    %cst_5 = arith.constant dense<0.000000e+00> : vector<128xf32>
    %11 = vector.multi_reduction <add>, %10, %cst_5 [0] : vector<8x128xf32> to vector<128xf32>
    %12 = vector.shape_cast %11 : vector<128xf32> to vector<1x128xf32>
    %cst_6 = arith.constant 1.250000e-01 : f32
    %13 = vector.broadcast %cst_6 : f32 to vector<1x128xf32>
    %14 = arith.mulf %12, %13 : vector<1x128xf32>
    %c0_7 = arith.constant 0 : index
    %c0_8 = arith.constant 0 : index
    %15 = vector.load %arg3[%c0_7, %c0_8] : memref<1x128xf32, #tpu.memory_space<vmem>>, vector<1x128xf32>
    %cst_9 = arith.constant 9.99999974E-6 : f32
    %16 = vector.broadcast %cst_9 : f32 to vector<1x128xf32>
    %17 = arith.addf %14, %16 : vector<1x128xf32>
    %18 = math.rsqrt %17 : vector<1x128xf32>
    %19 = arith.mulf %15, %18 : vector<1x128xf32>
    %c0_10 = arith.constant 0 : index
    %c0_11 = arith.constant 0 : index
    %20 = vector.load %arg4[%c0_10, %c0_11] : memref<1x128xf32, #tpu.memory_space<vmem>>, vector<1x128xf32>
    %21 = arith.mulf %7, %19 : vector<1x128xf32>
    %22 = arith.subf %20, %21 : vector<1x128xf32>
    %23 = vector.broadcast %19 : vector<1x128xf32> to vector<8x128xf32>
    %24 = arith.mulf %3, %23 : vector<8x128xf32>
    %25 = vector.broadcast %22 : vector<1x128xf32> to vector<8x128xf32>
    %26 = arith.addf %24, %25 : vector<8x128xf32>
    %c0_12 = arith.constant 0 : index
    %c0_13 = arith.constant 0 : index
    %27 = vector.load %arg1[%c0_12, %c0_13] : memref<8x128xf32, #tpu.memory_space<vmem>>, vector<8x128xf32>
    %28 = tpu.concatenate %26, %27 in 0 : vector<8x128xf32>, vector<8x128xf32> -> vector<16x128xf32>
    %29 = arith.truncf %28 : vector<16x128xf32> to vector<16x128xbf16>
    %c0_14 = arith.constant 0 : index
    %c0_15 = arith.constant 0 : index
    %30 = vector.load %arg5[%c0_14, %c0_15] : memref<128x128xbf16, #tpu.memory_space<vmem>>, vector<128x128xbf16>
    %cst_16 = arith.constant dense<0.000000e+00> : vector<16x128xf32>
    %31 = tpu.matmul %29, %30, %cst_16 {dimension_numbers = #tpu.dot_dimension_numbers<[1], [0], [0], [1], [0, 0, 1, 1], [], []>} : vector<16x128xbf16>, vector<128x128xbf16>, vector<16x128xf32> -> vector<16x128xf32>
    %32 = vector.extract_strided_slice %31 {offsets = [0, 0], sizes = [8, 128], strides = [1, 1]} : vector<16x128xf32> to vector<8x128xf32>
    %cst_17 = arith.constant dense<0.000000e+00> : vector<128xf32>
    %33 = vector.multi_reduction <add>, %32, %cst_17 [0] : vector<8x128xf32> to vector<128xf32>
    %34 = vector.shape_cast %33 : vector<128xf32> to vector<1x128xf32>
    %cst_18 = arith.constant 1.250000e-01 : f32
    %35 = vector.broadcast %cst_18 : f32 to vector<1x128xf32>
    %36 = arith.mulf %34, %35 : vector<1x128xf32>
    %37 = vector.broadcast %36 : vector<1x128xf32> to vector<8x128xf32>
    %38 = arith.subf %32, %37 : vector<8x128xf32>
    %39 = arith.mulf %38, %38 : vector<8x128xf32>
    %cst_19 = arith.constant dense<0.000000e+00> : vector<128xf32>
    %40 = vector.multi_reduction <add>, %39, %cst_19 [0] : vector<8x128xf32> to vector<128xf32>
    %41 = vector.shape_cast %40 : vector<128xf32> to vector<1x128xf32>
    %cst_20 = arith.constant 1.250000e-01 : f32
    %42 = vector.broadcast %cst_20 : f32 to vector<1x128xf32>
    %43 = arith.mulf %41, %42 : vector<1x128xf32>
    %c0_21 = arith.constant 0 : index
    %c0_22 = arith.constant 0 : index
    %44 = vector.load %arg6[%c0_21, %c0_22] : memref<1x128xf32, #tpu.memory_space<vmem>>, vector<1x128xf32>
    %cst_23 = arith.constant 9.99999974E-6 : f32
    %45 = vector.broadcast %cst_23 : f32 to vector<1x128xf32>
    %46 = arith.addf %43, %45 : vector<1x128xf32>
    %47 = math.rsqrt %46 : vector<1x128xf32>
    %48 = arith.mulf %44, %47 : vector<1x128xf32>
    %c0_24 = arith.constant 0 : index
    %c0_25 = arith.constant 0 : index
    %49 = vector.load %arg7[%c0_24, %c0_25] : memref<1x128xf32, #tpu.memory_space<vmem>>, vector<1x128xf32>
    %50 = arith.mulf %36, %48 : vector<1x128xf32>
    %51 = arith.subf %49, %50 : vector<1x128xf32>
    %52 = vector.broadcast %48 : vector<1x128xf32> to vector<8x128xf32>
    %53 = arith.mulf %32, %52 : vector<8x128xf32>
    %54 = vector.broadcast %51 : vector<1x128xf32> to vector<8x128xf32>
    %55 = arith.addf %53, %54 : vector<8x128xf32>
    %56 = vector.extract_strided_slice %31 {offsets = [8, 0], sizes = [8, 128], strides = [1, 1]} : vector<16x128xf32> to vector<8x128xf32>
    %cst_26 = arith.constant dense<0.000000e+00> : vector<128xf32>
    %57 = vector.multi_reduction <add>, %56, %cst_26 [0] : vector<8x128xf32> to vector<128xf32>
    %58 = vector.shape_cast %57 : vector<128xf32> to vector<1x128xf32>
    %cst_27 = arith.constant 1.250000e-01 : f32
    %59 = vector.broadcast %cst_27 : f32 to vector<1x128xf32>
    %60 = arith.mulf %58, %59 : vector<1x128xf32>
    %61 = vector.broadcast %60 : vector<1x128xf32> to vector<8x128xf32>
    %62 = arith.subf %56, %61 : vector<8x128xf32>
    %63 = arith.mulf %62, %62 : vector<8x128xf32>
    %cst_28 = arith.constant dense<0.000000e+00> : vector<128xf32>
    %64 = vector.multi_reduction <add>, %63, %cst_28 [0] : vector<8x128xf32> to vector<128xf32>
    %65 = vector.shape_cast %64 : vector<128xf32> to vector<1x128xf32>
    %cst_29 = arith.constant 1.250000e-01 : f32
    %66 = vector.broadcast %cst_29 : f32 to vector<1x128xf32>
    %67 = arith.mulf %65, %66 : vector<1x128xf32>
    %c0_30 = arith.constant 0 : index
    %c0_31 = arith.constant 0 : index
    %68 = vector.load %arg6[%c0_30, %c0_31] : memref<1x128xf32, #tpu.memory_space<vmem>>, vector<1x128xf32>
    %cst_32 = arith.constant 9.99999974E-6 : f32
    %69 = vector.broadcast %cst_32 : f32 to vector<1x128xf32>
    %70 = arith.addf %67, %69 : vector<1x128xf32>
    %71 = math.rsqrt %70 : vector<1x128xf32>
    %72 = arith.mulf %68, %71 : vector<1x128xf32>
    %c0_33 = arith.constant 0 : index
    %c0_34 = arith.constant 0 : index
    %73 = vector.load %arg7[%c0_33, %c0_34] : memref<1x128xf32, #tpu.memory_space<vmem>>, vector<1x128xf32>
    %74 = arith.mulf %60, %72 : vector<1x128xf32>
    %75 = arith.subf %73, %74 : vector<1x128xf32>
    %76 = vector.broadcast %72 : vector<1x128xf32> to vector<8x128xf32>
    %77 = arith.mulf %56, %76 : vector<8x128xf32>
    %78 = vector.broadcast %75 : vector<1x128xf32> to vector<8x128xf32>
    %79 = arith.addf %77, %78 : vector<8x128xf32>
    %80 = tpu.concatenate %55, %79 in 0 : vector<8x128xf32>, vector<8x128xf32> -> vector<16x128xf32>
    %cst_35 = arith.constant 0.00999999977 : f32
    %81 = vector.broadcast %cst_35 : f32 to vector<16x128xf32>
    %82 = arith.mulf %81, %80 : vector<16x128xf32>
    %83 = arith.maximumf %80, %82 : vector<16x128xf32>
    %84 = arith.truncf %83 : vector<16x128xf32> to vector<16x128xbf16>
    %c0_36 = arith.constant 0 : index
    %c0_37 = arith.constant 0 : index
    %85 = vector.load %arg8[%c0_36, %c0_37] : memref<128x128xbf16, #tpu.memory_space<vmem>>, vector<128x128xbf16>
    %cst_38 = arith.constant dense<0.000000e+00> : vector<16x128xf32>
    %86 = tpu.matmul %84, %85, %cst_38 {dimension_numbers = #tpu.dot_dimension_numbers<[1], [0], [0], [1], [0, 0, 1, 1], [], []>} : vector<16x128xbf16>, vector<128x128xbf16>, vector<16x128xf32> -> vector<16x128xf32>
    %87 = vector.extract_strided_slice %86 {offsets = [0, 0], sizes = [8, 128], strides = [1, 1]} : vector<16x128xf32> to vector<8x128xf32>
    %cst_39 = arith.constant dense<0.000000e+00> : vector<128xf32>
    %88 = vector.multi_reduction <add>, %87, %cst_39 [0] : vector<8x128xf32> to vector<128xf32>
    %89 = vector.shape_cast %88 : vector<128xf32> to vector<1x128xf32>
    %cst_40 = arith.constant 1.250000e-01 : f32
    %90 = vector.broadcast %cst_40 : f32 to vector<1x128xf32>
    %91 = arith.mulf %89, %90 : vector<1x128xf32>
    %92 = vector.broadcast %91 : vector<1x128xf32> to vector<8x128xf32>
    %93 = arith.subf %87, %92 : vector<8x128xf32>
    %94 = arith.mulf %93, %93 : vector<8x128xf32>
    %cst_41 = arith.constant dense<0.000000e+00> : vector<128xf32>
    %95 = vector.multi_reduction <add>, %94, %cst_41 [0] : vector<8x128xf32> to vector<128xf32>
    %96 = vector.shape_cast %95 : vector<128xf32> to vector<1x128xf32>
    %cst_42 = arith.constant 1.250000e-01 : f32
    %97 = vector.broadcast %cst_42 : f32 to vector<1x128xf32>
    %98 = arith.mulf %96, %97 : vector<1x128xf32>
    %c0_43 = arith.constant 0 : index
    %c0_44 = arith.constant 0 : index
    %99 = vector.load %arg9[%c0_43, %c0_44] : memref<1x128xf32, #tpu.memory_space<vmem>>, vector<1x128xf32>
    %cst_45 = arith.constant 9.99999974E-6 : f32
    %100 = vector.broadcast %cst_45 : f32 to vector<1x128xf32>
    %101 = arith.addf %98, %100 : vector<1x128xf32>
    %102 = math.rsqrt %101 : vector<1x128xf32>
    %103 = arith.mulf %99, %102 : vector<1x128xf32>
    %c0_46 = arith.constant 0 : index
    %c0_47 = arith.constant 0 : index
    %104 = vector.load %arg10[%c0_46, %c0_47] : memref<1x128xf32, #tpu.memory_space<vmem>>, vector<1x128xf32>
    %105 = arith.mulf %91, %103 : vector<1x128xf32>
    %106 = arith.subf %104, %105 : vector<1x128xf32>
    %107 = vector.broadcast %103 : vector<1x128xf32> to vector<8x128xf32>
    %108 = arith.mulf %87, %107 : vector<8x128xf32>
    %109 = vector.broadcast %106 : vector<1x128xf32> to vector<8x128xf32>
    %110 = arith.addf %108, %109 : vector<8x128xf32>
    %111 = vector.extract_strided_slice %86 {offsets = [8, 0], sizes = [8, 128], strides = [1, 1]} : vector<16x128xf32> to vector<8x128xf32>
    %cst_48 = arith.constant dense<0.000000e+00> : vector<128xf32>
    %112 = vector.multi_reduction <add>, %111, %cst_48 [0] : vector<8x128xf32> to vector<128xf32>
    %113 = vector.shape_cast %112 : vector<128xf32> to vector<1x128xf32>
    %cst_49 = arith.constant 1.250000e-01 : f32
    %114 = vector.broadcast %cst_49 : f32 to vector<1x128xf32>
    %115 = arith.mulf %113, %114 : vector<1x128xf32>
    %116 = vector.broadcast %115 : vector<1x128xf32> to vector<8x128xf32>
    %117 = arith.subf %111, %116 : vector<8x128xf32>
    %118 = arith.mulf %117, %117 : vector<8x128xf32>
    %cst_50 = arith.constant dense<0.000000e+00> : vector<128xf32>
    %119 = vector.multi_reduction <add>, %118, %cst_50 [0] : vector<8x128xf32> to vector<128xf32>
    %120 = vector.shape_cast %119 : vector<128xf32> to vector<1x128xf32>
    %cst_51 = arith.constant 1.250000e-01 : f32
    %121 = vector.broadcast %cst_51 : f32 to vector<1x128xf32>
    %122 = arith.mulf %120, %121 : vector<1x128xf32>
    %c0_52 = arith.constant 0 : index
    %c0_53 = arith.constant 0 : index
    %123 = vector.load %arg9[%c0_52, %c0_53] : memref<1x128xf32, #tpu.memory_space<vmem>>, vector<1x128xf32>
    %cst_54 = arith.constant 9.99999974E-6 : f32
    %124 = vector.broadcast %cst_54 : f32 to vector<1x128xf32>
    %125 = arith.addf %122, %124 : vector<1x128xf32>
    %126 = math.rsqrt %125 : vector<1x128xf32>
    %127 = arith.mulf %123, %126 : vector<1x128xf32>
    %c0_55 = arith.constant 0 : index
    %c0_56 = arith.constant 0 : index
    %128 = vector.load %arg10[%c0_55, %c0_56] : memref<1x128xf32, #tpu.memory_space<vmem>>, vector<1x128xf32>
    %129 = arith.mulf %115, %127 : vector<1x128xf32>
    %130 = arith.subf %128, %129 : vector<1x128xf32>
    %131 = vector.broadcast %127 : vector<1x128xf32> to vector<8x128xf32>
    %132 = arith.mulf %111, %131 : vector<8x128xf32>
    %133 = vector.broadcast %130 : vector<1x128xf32> to vector<8x128xf32>
    %134 = arith.addf %132, %133 : vector<8x128xf32>
    %135 = tpu.concatenate %110, %134 in 0 : vector<8x128xf32>, vector<8x128xf32> -> vector<16x128xf32>
    %cst_57 = arith.constant 0.00999999977 : f32
    %136 = vector.broadcast %cst_57 : f32 to vector<16x128xf32>
    %137 = arith.mulf %136, %135 : vector<16x128xf32>
    %138 = arith.maximumf %135, %137 : vector<16x128xf32>
    %139 = vector.extract_strided_slice %138 {offsets = [0, 0], sizes = [8, 128], strides = [1, 1]} : vector<16x128xf32> to vector<8x128xf32>
    %140 = vector.extract_strided_slice %138 {offsets = [8, 0], sizes = [8, 128], strides = [1, 1]} : vector<16x128xf32> to vector<8x128xf32>
    %c0_58 = arith.constant 0 : index
    %c0_59 = arith.constant 0 : index
    %141 = vector.load %arg21[%c0_58, %c0_59] : memref<8x128xf32, #tpu.memory_space<vmem>>, vector<8x128xf32>
    tpu.vector_store %arg21[%c0_58, %c0_59], %139 {strides = array<i32>} : memref<8x128xf32, #tpu.memory_space<vmem>>, vector<8x128xf32>,
    %c0_60 = arith.constant 0 : index
    %c0_61 = arith.constant 0 : index
    %142 = vector.load %arg22[%c0_60, %c0_61] : memref<8x128xf32, #tpu.memory_space<vmem>>, vector<8x128xf32>
    tpu.vector_store %arg22[%c0_60, %c0_61], %140 {strides = array<i32>} : memref<8x128xf32, #tpu.memory_space<vmem>>, vector<8x128xf32>,
    %143 = arith.truncf %139 : vector<8x128xf32> to vector<8x128xbf16>
    %144 = arith.truncf %140 : vector<8x128xf32> to vector<8x128xbf16>
    %c0_62 = arith.constant 0 : index
    %c0_63 = arith.constant 0 : index
    %145 = vector.load %arg11[%c0_62, %c0_63] : memref<128x128xbf16, #tpu.memory_space<vmem>>, vector<128x128xbf16>
    %cst_64 = arith.constant dense<0.000000e+00> : vector<8x128xf32>
    %146 = tpu.matmul %143, %145, %cst_64 {dimension_numbers = #tpu.dot_dimension_numbers<[1], [0], [0], [1], [0, 0, 1, 1], [], []>} : vector<8x128xbf16>, vector<128x128xbf16>, vector<8x128xf32> -> vector<8x128xf32>
    %cst_65 = arith.constant dense<0.000000e+00> : vector<128xf32>
    %147 = vector.multi_reduction <add>, %146, %cst_65 [0] : vector<8x128xf32> to vector<128xf32>
    %148 = vector.shape_cast %147 : vector<128xf32> to vector<1x128xf32>
    %cst_66 = arith.constant 1.250000e-01 : f32
    %149 = vector.broadcast %cst_66 : f32 to vector<1x128xf32>
    %150 = arith.mulf %148, %149 : vector<1x128xf32>
    %151 = vector.broadcast %150 : vector<1x128xf32> to vector<8x128xf32>
    %152 = arith.subf %146, %151 : vector<8x128xf32>
    %153 = arith.mulf %152, %152 : vector<8x128xf32>
    %cst_67 = arith.constant dense<0.000000e+00> : vector<128xf32>
    %154 = vector.multi_reduction <add>, %153, %cst_67 [0] : vector<8x128xf32> to vector<128xf32>
    %155 = vector.shape_cast %154 : vector<128xf32> to vector<1x128xf32>
    %cst_68 = arith.constant 1.250000e-01 : f32
    %156 = vector.broadcast %cst_68 : f32 to vector<1x128xf32>
    %157 = arith.mulf %155, %156 : vector<1x128xf32>
    %c0_69 = arith.constant 0 : index
    %c0_70 = arith.constant 0 : index
    %158 = vector.load %arg12[%c0_69, %c0_70] : memref<1x128xf32, #tpu.memory_space<vmem>>, vector<1x128xf32>
    %cst_71 = arith.constant 9.99999974E-6 : f32
    %159 = vector.broadcast %cst_71 : f32 to vector<1x128xf32>
    %160 = arith.addf %157, %159 : vector<1x128xf32>
    %161 = math.rsqrt %160 : vector<1x128xf32>
    %162 = arith.mulf %158, %161 : vector<1x128xf32>
    %c0_72 = arith.constant 0 : index
    %c0_73 = arith.constant 0 : index
    %163 = vector.load %arg13[%c0_72, %c0_73] : memref<1x128xf32, #tpu.memory_space<vmem>>, vector<1x128xf32>
    %164 = arith.mulf %150, %162 : vector<1x128xf32>
    %165 = arith.subf %163, %164 : vector<1x128xf32>
    %166 = vector.broadcast %162 : vector<1x128xf32> to vector<8x128xf32>
    %167 = arith.mulf %146, %166 : vector<8x128xf32>
    %168 = vector.broadcast %165 : vector<1x128xf32> to vector<8x128xf32>
    %169 = arith.addf %167, %168 : vector<8x128xf32>
    %cst_74 = arith.constant 0.00999999977 : f32
    %170 = vector.broadcast %cst_74 : f32 to vector<8x128xf32>
    %171 = arith.mulf %170, %169 : vector<8x128xf32>
    %172 = arith.maximumf %169, %171 : vector<8x128xf32>
    %173 = arith.truncf %172 : vector<8x128xf32> to vector<8x128xbf16>
    %c0_75 = arith.constant 0 : index
    %c0_76 = arith.constant 0 : index
    %174 = vector.load %arg14[%c0_75, %c0_76] : memref<128x128xbf16, #tpu.memory_space<vmem>>, vector<128x128xbf16>
    %cst_77 = arith.constant dense<0.000000e+00> : vector<8x128xf32>
    %175 = tpu.matmul %173, %174, %cst_77 {dimension_numbers = #tpu.dot_dimension_numbers<[1], [0], [0], [1], [0, 0, 1, 1], [], []>} : vector<8x128xbf16>, vector<128x128xbf16>, vector<8x128xf32> -> vector<8x128xf32>
    %cst_78 = arith.constant dense<0.000000e+00> : vector<128xf32>
    %176 = vector.multi_reduction <add>, %175, %cst_78 [0] : vector<8x128xf32> to vector<128xf32>
    %177 = vector.shape_cast %176 : vector<128xf32> to vector<1x128xf32>
    %cst_79 = arith.constant 1.250000e-01 : f32
    %178 = vector.broadcast %cst_79 : f32 to vector<1x128xf32>
    %179 = arith.mulf %177, %178 : vector<1x128xf32>
    %180 = vector.broadcast %179 : vector<1x128xf32> to vector<8x128xf32>
    %181 = arith.subf %175, %180 : vector<8x128xf32>
    %182 = arith.mulf %181, %181 : vector<8x128xf32>
    %cst_80 = arith.constant dense<0.000000e+00> : vector<128xf32>
    %183 = vector.multi_reduction <add>, %182, %cst_80 [0] : vector<8x128xf32> to vector<128xf32>
    %184 = vector.shape_cast %183 : vector<128xf32> to vector<1x128xf32>
    %cst_81 = arith.constant 1.250000e-01 : f32
    %185 = vector.broadcast %cst_81 : f32 to vector<1x128xf32>
    %186 = arith.mulf %184, %185 : vector<1x128xf32>
    %c0_82 = arith.constant 0 : index
    %c0_83 = arith.constant 0 : index
    %187 = vector.load %arg15[%c0_82, %c0_83] : memref<1x128xf32, #tpu.memory_space<vmem>>, vector<1x128xf32>
    %cst_84 = arith.constant 9.99999974E-6 : f32
    %188 = vector.broadcast %cst_84 : f32 to vector<1x128xf32>
    %189 = arith.addf %186, %188 : vector<1x128xf32>
    %190 = math.rsqrt %189 : vector<1x128xf32>
    %191 = arith.mulf %187, %190 : vector<1x128xf32>
    %c0_85 = arith.constant 0 : index
    %c0_86 = arith.constant 0 : index
    %192 = vector.load %arg16[%c0_85, %c0_86] : memref<1x128xf32, #tpu.memory_space<vmem>>, vector<1x128xf32>
    %193 = arith.mulf %179, %191 : vector<1x128xf32>
    %194 = arith.subf %192, %193 : vector<1x128xf32>
    %195 = vector.broadcast %191 : vector<1x128xf32> to vector<8x128xf32>
    %196 = arith.mulf %175, %195 : vector<8x128xf32>
    %197 = vector.broadcast %194 : vector<1x128xf32> to vector<8x128xf32>
    %198 = arith.addf %196, %197 : vector<8x128xf32>
    %cst_87 = arith.constant 0.00999999977 : f32
    %199 = vector.broadcast %cst_87 : f32 to vector<8x128xf32>
    %200 = arith.mulf %199, %198 : vector<8x128xf32>
    %201 = arith.maximumf %198, %200 : vector<8x128xf32>
    %202 = arith.truncf %201 : vector<8x128xf32> to vector<8x128xbf16>
    %c0_88 = arith.constant 0 : index
    %c0_89 = arith.constant 0 : index
    %203 = vector.load %arg17[%c0_88, %c0_89] : memref<128x128xbf16, #tpu.memory_space<vmem>>, vector<128x128xbf16>
    %cst_90 = arith.constant dense<0.000000e+00> : vector<8x128xf32>
    %204 = tpu.matmul %202, %203, %cst_90 {dimension_numbers = #tpu.dot_dimension_numbers<[1], [0], [0], [1], [0, 0, 1, 1], [], []>} : vector<8x128xbf16>, vector<128x128xbf16>, vector<8x128xf32> -> vector<8x128xf32>
    %c0_91 = arith.constant 0 : index
    %c0_92 = arith.constant 0 : index
    %205 = vector.load %arg18[%c0_91, %c0_92] : memref<1x128xf32, #tpu.memory_space<vmem>>, vector<1x128xf32>
    %206 = vector.broadcast %205 : vector<1x128xf32> to vector<8x128xf32>
    %207 = arith.addf %204, %206 : vector<8x128xf32>
    %c0_93 = arith.constant 0 : index
    %c0_94 = arith.constant 0 : index
    %208 = vector.load %arg24[%c0_93, %c0_94] : memref<8x128xf32, #tpu.memory_space<vmem>>, vector<8x128xf32>
    tpu.vector_store %arg24[%c0_93, %c0_94], %207 {strides = array<i32>} : memref<8x128xf32, #tpu.memory_space<vmem>>, vector<8x128xf32>,
    %209 = tpu.concatenate %143, %144 in 1 : vector<8x128xbf16>, vector<8x128xbf16> -> vector<8x256xbf16>
    %c0_95 = arith.constant 0 : index
    %c0_96 = arith.constant 0 : index
    %210 = vector.load %arg19[%c0_95, %c0_96] : memref<256x128xbf16, #tpu.memory_space<vmem>>, vector<256x128xbf16>
    %cst_97 = arith.constant dense<0.000000e+00> : vector<8x128xf32>
    %211 = tpu.matmul %209, %210, %cst_97 {dimension_numbers = #tpu.dot_dimension_numbers<[1], [0], [0], [1], [0, 0, 1, 1], [], []>} : vector<8x256xbf16>, vector<256x128xbf16>, vector<8x128xf32> -> vector<8x128xf32>
    %c0_98 = arith.constant 0 : index
    %c0_99 = arith.constant 0 : index
    %212 = vector.load %arg20[%c0_98, %c0_99] : memref<1x128xf32, #tpu.memory_space<vmem>>, vector<1x128xf32>
    %213 = vector.broadcast %212 : vector<1x128xf32> to vector<8x128xf32>
    %214 = arith.addf %211, %213 : vector<8x128xf32>
    %c0_100 = arith.constant 0 : index
    %c0_101 = arith.constant 0 : index
    %215 = vector.load %arg23[%c0_100, %c0_101] : memref<8x128xf32, #tpu.memory_space<vmem>>, vector<8x128xf32>
    tpu.vector_store %arg23[%c0_100, %c0_101], %214 {strides = array<i32>} : memref<8x128xf32, #tpu.memory_space<vmem>>, vector<8x128xf32>,
    return
  }
}

</mosaic_0001>

<llo_original>
// kernel: tpu_custom_call.1
$region0: #{tpu_custom_call.1}
  #allocation0 [shape = 'u32[]', space=smem, size = 0x4, offset = 0x4, fixed_abs, tag = 'smem constant byte address 0x4 - core index']
  #allocation1 [shape = 'u32[144,128]{1,0:T(1,128)}', space=vmem, size = 0x12000, scoped, tag = 'internal scratch']
  %s0 = inlined_call_operand.hbm [shape: f32[8,128], index: 0, kind: input, shape index: {}]
  %s1 = inlined_call_operand.hbm [shape: f32[8,128], index: 1, kind: input, shape index: {}]
  %s2 = inlined_call_operand.hbm [shape: bf16[128,128], index: 2, kind: input, shape index: {}]
  %s3 = inlined_call_operand.hbm [shape: f32[1,128], index: 3, kind: input, shape index: {}]
  %s4 = inlined_call_operand.hbm [shape: f32[1,128], index: 4, kind: input, shape index: {}]
  %s5 = inlined_call_operand.hbm [shape: bf16[128,128], index: 5, kind: input, shape index: {}]
  %s6 = inlined_call_operand.hbm [shape: f32[1,128], index: 6, kind: input, shape index: {}]
  %s7 = inlined_call_operand.hbm [shape: f32[1,128], index: 7, kind: input, shape index: {}]
  %s8 = inlined_call_operand.hbm [shape: bf16[128,128], index: 8, kind: input, shape index: {}]
  %s9 = inlined_call_operand.hbm [shape: f32[1,128], index: 9, kind: input, shape index: {}]
  %s10 = inlined_call_operand.hbm [shape: f32[1,128], index: 10, kind: input, shape index: {}]
  %s11 = inlined_call_operand.hbm [shape: bf16[128,128], index: 11, kind: input, shape index: {}]
  %s12 = inlined_call_operand.hbm [shape: f32[1,128], index: 12, kind: input, shape index: {}]
  %s13 = inlined_call_operand.hbm [shape: f32[1,128], index: 13, kind: input, shape index: {}]
  %s14 = inlined_call_operand.hbm [shape: bf16[128,128], index: 14, kind: input, shape index: {}]
  %s15 = inlined_call_operand.hbm [shape: f32[1,128], index: 15, kind: input, shape index: {}]
  %s16 = inlined_call_operand.hbm [shape: f32[1,128], index: 16, kind: input, shape index: {}]
  %s17 = inlined_call_operand.vmem [shape: bf16[128,128], index: 17, kind: input, shape index: {}]
  %s18 = inlined_call_operand.vmem [shape: f32[1,128], index: 18, kind: input, shape index: {}]
  %s19 = inlined_call_operand.hbm [shape: bf16[256,128], index: 19, kind: input, shape index: {}]
  %s20 = inlined_call_operand.vmem [shape: f32[1,128], index: 20, kind: input, shape index: {}]
  %s21 = inlined_call_operand.hbm [shape: f32[8,128], index: 21, kind: output, shape index: {0}]
  %s22 = inlined_call_operand.hbm [shape: f32[8,128], index: 22, kind: output, shape index: {1}]
  %s23 = inlined_call_operand.hbm [shape: f32[8,128], index: 23, kind: output, shape index: {2}]
  %s24 = inlined_call_operand.hbm [shape: f32[8,128], index: 24, kind: output, shape index: {3}]
  %25 = xla_tuple %s21, %s22, %s23, %s24
  %s26 = sld [smem:[#allocation0]]
  $region190: #{tpu_custom_call.1} parent=0
    _
  %s28 = ssub.s32 1, %s26
  %s29 = scalar_select 0, %s28, %s26
  $region1: #{tpu_custom_call.1} parent=0
    #allocation2 [shape = 'u8[4096]{0}', space=vmem, size = 0x1000, scoped, tag = 'input window, operand 0, single buffered']
    #allocation3 [shape = 's32[1]{0}', space=sflag, size = 0x4, scoped, tag = 'scoped memory for tpu_custom_call.1']
    #allocation4 [shape = 's32[1]{0}', space=sflag, size = 0x4, scoped, tag = 'scoped memory for tpu_custom_call.1']
    #allocation5 [shape = 'u8[4096]{0}', space=vmem, size = 0x1000, scoped, tag = 'input window, operand 1, single buffered']
    #allocation6 [shape = 's32[1]{0}', space=sflag, size = 0x4, scoped, tag = 'scoped memory for tpu_custom_call.1']
    #allocation7 [shape = 'u8[32768]{0}', space=vmem, size = 0x8000, scoped, tag = 'input window, operand 2, single buffered']
    #allocation8 [shape = 'u8[512]{0}', space=vmem, size = 0x400, scoped, tag = 'input window, operand 3, single buffered']
    #allocation9 [shape = 's32[1]{0}', space=sflag, size = 0x4, scoped, tag = 'scoped memory for tpu_custom_call.1']
    #allocation10 [shape = 'u8[512]{0}', space=vmem, size = 0x400, scoped, tag = 'input window, operand 4, single buffered']
    #allocation11 [shape = 'u8[32768]{0}', space=vmem, size = 0x8000, scoped, tag = 'input window, operand 5, single buffered']
    #allocation12 [shape = 's32[1]{0}', space=sflag, size = 0x4, scoped, tag = 'scoped memory for tpu_custom_call.1']
    #allocation13 [shape = 'u8[512]{0}', space=vmem, size = 0x400, scoped, tag = 'input window, operand 6, single buffered']
    #allocation14 [shape = 'u8[512]{0}', space=vmem, size = 0x400, scoped, tag = 'input window, operand 7, single buffered']
    #allocation15 [shape = 's32[1]{0}', space=sflag, size = 0x4, scoped, tag = 'scoped memory for tpu_custom_call.1']
    #allocation16 [shape = 'u8[32768]{0}', space=vmem, size = 0x8000, scoped, tag = 'input window, operand 8, single buffered']
    #allocation17 [shape = 'u8[512]{0}', space=vmem, size = 0x400, scoped, tag = 'input window, operand 9, single buffered']
    #allocation18 [shape = 's32[1]{0}', space=sflag, size = 0x4, scoped, tag = 'scoped memory for tpu_custom_call.1']
    #allocation19 [shape = 'u8[512]{0}', space=vmem, size = 0x400, scoped, tag = 'input window, operand 10, single buffered']
    #allocation20 [shape = 'u8[32768]{0}', space=vmem, size = 0x8000, scoped, tag = 'input window, operand 11, single buffered']
    #allocation21 [shape = 's32[1]{0}', space=sflag, size = 0x4, scoped, tag = 'scoped memory for tpu_custom_call.1']
    #allocation22 [shape = 'u8[512]{0}', space=vmem, size = 0x400, scoped, tag = 'input window, operand 12, single buffered']
    #allocation23 [shape = 'u8[512]{0}', space=vmem, size = 0x400, scoped, tag = 'input window, operand 13, single buffered']
    #allocation24 [shape = 's32[1]{0}', space=sflag, size = 0x4, scoped, tag = 'scoped memory for tpu_custom_call.1']
    #allocation25 [shape = 'u8[32768]{0}', space=vmem, size = 0x8000, scoped, tag = 'input window, operand 14, single buffered']
    #allocation26 [shape = 'u8[512]{0}', space=vmem, size = 0x400, scoped, tag = 'input window, operand 15, single buffered']
    #allocation27 [shape = 's32[1]{0}', space=sflag, size = 0x4, scoped, tag = 'scoped memory for tpu_custom_call.1']
    #allocation28 [shape = 'u8[512]{0}', space=vmem, size = 0x400, scoped, tag = 'input window, operand 16, single buffered']
    #allocation29 [shape = 'u8[65536]{0}', space=vmem, size = 0x10000, scoped, tag = 'input window, operand 19, single buffered']
    #allocation30 [shape = 's32[1]{0}', space=sflag, size = 0x4, scoped, tag = 'scoped memory for tpu_custom_call.1']
    #allocation31 [shape = 'u8[4096]{0}', space=vmem, size = 0x1000, scoped, tag = 'output window, operand 0, single buffered']
    #allocation32 [shape = 'u8[4096]{0}', space=vmem, size = 0x1000, scoped, tag = 'output window, operand 1, single buffered']
    #allocation33 [shape = 's32[1]{0}', space=sflag, size = 0x4, scoped, tag = 'scoped memory for tpu_custom_call.1']
    #allocation34 [shape = 'u8[4096]{0}', space=vmem, size = 0x1000, scoped, tag = 'output window, operand 2, single buffered']
    #allocation35 [shape = 'u8[4096]{0}', space=vmem, size = 0x1000, scoped, tag = 'output window, operand 3, single buffered']
    #allocation36 [shape = 's32[1]{0}', space=sflag, size = 0x4, scoped, tag = 'scoped memory for tpu_custom_call.1']
    %30 = vsyncpa [#allocation3], 0
    %31 = vsyncpa [#allocation6], 0
    %32 = vsyncpa [#allocation9], 0
    %33 = vsyncpa [#allocation12], 0
    %34 = vsyncpa [#allocation15], 0
    %35 = vsyncpa [#allocation18], 0
    %36 = vsyncpa [#allocation21], 0
    %37 = vsyncpa [#allocation24], 0
    %38 = vsyncpa [#allocation27], 0
    %39 = vsyncpa [#allocation30], 0
    %40 = vsyncpa [#allocation4], 0
    %41 = vsyncpa [#allocation33], 0
    %42 = vsyncpa [#allocation36], 0
    // Predicated region
    $region2: #{tpu_custom_call.1} parent=1 // pred_check
      _
    $region3: #{tpu_custom_call.1} parent=1 // pred_check_branch
      %44 = sbr.rel (0) target = $region5
    $region4: #{tpu_custom_call.1} parent=1 // pred_region
      %s46 = ssub.s32 128, 128
      %47 = vsyncadd [#allocation3], %s46
      %s49 = sshll.u32 [#allocation2], 4
      %s50 = int_to_ptr.vmem [resolvable:$true] %s49
      %52 = dma.hbm_to_vmem [thread:$0]  %s0, 128, %s50, [#allocation3]
    $region5: #{tpu_custom_call.1} parent=1 // pred_fallthru
      _
    // Predicated region
    $region6: #{tpu_custom_call.1} parent=1 // pred_check
      _
    $region7: #{tpu_custom_call.1} parent=1 // pred_check_branch
      %54 = sbr.rel (0) target = $region9
    $region8: #{tpu_custom_call.1} parent=1 // pred_region
      %s56 = ssub.s32 128, 128
      %57 = vsyncadd [#allocation6], %s56
      %s59 = sshll.u32 [#allocation5], 4
      %s60 = int_to_ptr.vmem [resolvable:$true] %s59
      %62 = dma.hbm_to_vmem [thread:$0]  %s1, 128, %s60, [#allocation6]
    $region9: #{tpu_custom_call.1} parent=1 // pred_fallthru
      _
    // Predicated region
    $region10: #{tpu_custom_call.1} parent=1 // pred_check
      _
    $region11: #{tpu_custom_call.1} parent=1 // pred_check_branch
      %64 = sbr.rel (0) target = $region13
    $region12: #{tpu_custom_call.1} parent=1 // pred_region
      %s66 = ssub.s32 1024, 1024
      %67 = vsyncadd [#allocation6], %s66
      %s68 = sshll.u32 [#allocation7], 4
      %s69 = int_to_ptr.vmem [resolvable:$true] %s68
      %74 = dma.hbm_to_vmem [thread:$0]  %s2, 1024, %s69, [#allocation6], 64, 64, 4
    $region13: #{tpu_custom_call.1} parent=1 // pred_fallthru
      _
    // Predicated region
    $region14: #{tpu_custom_call.1} parent=1 // pred_check
      _
    $region15: #{tpu_custom_call.1} parent=1 // pred_check_branch
      %76 = sbr.rel (0) target = $region17
    $region16: #{tpu_custom_call.1} parent=1 // pred_region
      %s78 = ssub.s32 16, 16
      %79 = vsyncadd [#allocation9], %s78
      %s81 = sshll.u32 [#allocation8], 4
      %s82 = int_to_ptr.vmem [resolvable:$true] %s81
      %84 = dma.hbm_to_vmem [thread:$0]  %s3, 16, %s82, [#allocation9]
    $region17: #{tpu_custom_call.1} parent=1 // pred_fallthru
      _
    // Predicated region
    $region18: #{tpu_custom_call.1} parent=1 // pred_check
      _
    $region19: #{tpu_custom_call.1} parent=1 // pred_check_branch
      %86 = sbr.rel (0) target = $region21
    $region20: #{tpu_custom_call.1} parent=1 // pred_region
      %s88 = ssub.s32 16, 16
      %89 = vsyncadd [#allocation9], %s88
      %s91 = sshll.u32 [#allocation10], 4
      %s92 = int_to_ptr.vmem [resolvable:$true] %s91
      %94 = dma.hbm_to_vmem [thread:$0]  %s4, 16, %s92, [#allocation9]
    $region21: #{tpu_custom_call.1} parent=1 // pred_fallthru
      _
    // Predicated region
    $region22: #{tpu_custom_call.1} parent=1 // pred_check
      _
    $region23: #{tpu_custom_call.1} parent=1 // pred_check_branch
      %96 = sbr.rel (0) target = $region25
    $region24: #{tpu_custom_call.1} parent=1 // pred_region
      %s98 = ssub.s32 1024, 1024
      %99 = vsyncadd [#allocation12], %s98
      %s100 = sshll.u32 [#allocation11], 4
      %s101 = int_to_ptr.vmem [resolvable:$true] %s100
      %106 = dma.hbm_to_vmem [thread:$0]  %s5, 1024, %s101, [#allocation12], 64, 64, 4
    $region25: #{tpu_custom_call.1} parent=1 // pred_fallthru
      _
    // Predicated region
    $region26: #{tpu_custom_call.1} parent=1 // pred_check
      _
    $region27: #{tpu_custom_call.1} parent=1 // pred_check_branch
      %108 = sbr.rel (0) target = $region29
    $region28: #{tpu_custom_call.1} parent=1 // pred_region
      %s110 = ssub.s32 16, 16
      %111 = vsyncadd [#allocation12], %s110
      %s113 = sshll.u32 [#allocation13], 4
      %s114 = int_to_ptr.vmem [resolvable:$true] %s113
      %116 = dma.hbm_to_vmem [thread:$0]  %s6, 16, %s114, [#allocation12]
    $region29: #{tpu_custom_call.1} parent=1 // pred_fallthru
      _
    // Predicated region
    $region30: #{tpu_custom_call.1} parent=1 // pred_check
      _
    $region31: #{tpu_custom_call.1} parent=1 // pred_check_branch
      %118 = sbr.rel (0) target = $region33
    $region32: #{tpu_custom_call.1} parent=1 // pred_region
      %s120 = ssub.s32 16, 16
      %121 = vsyncadd [#allocation15], %s120
      %s123 = sshll.u32 [#allocation14], 4
      %s124 = int_to_ptr.vmem [resolvable:$true] %s123
      %126 = dma.hbm_to_vmem [thread:$0]  %s7, 16, %s124, [#allocation15]
    $region33: #{tpu_custom_call.1} parent=1 // pred_fallthru
      _
    // Predicated region
    $region34: #{tpu_custom_call.1} parent=1 // pred_check
      _
    $region35: #{tpu_custom_call.1} parent=1 // pred_check_branch
      %128 = sbr.rel (0) target = $region37
    $region36: #{tpu_custom_call.1} parent=1 // pred_region
      %s130 = ssub.s32 1024, 1024
      %131 = vsyncadd [#allocation15], %s130
      %s132 = sshll.u32 [#allocation16], 4
      %s133 = int_to_ptr.vmem [resolvable:$true] %s132
      %138 = dma.hbm_to_vmem [thread:$0]  %s8, 1024, %s133, [#allocation15], 64, 64, 4
    $region37: #{tpu_custom_call.1} parent=1 // pred_fallthru
      _
    // Predicated region
    $region38: #{tpu_custom_call.1} parent=1 // pred_check
      _
    $region39: #{tpu_custom_call.1} parent=1 // pred_check_branch
      %140 = sbr.rel (0) target = $region41
    $region40: #{tpu_custom_call.1} parent=1 // pred_region
      %s142 = ssub.s32 16, 16
      %143 = vsyncadd [#allocation18], %s142
      %s145 = sshll.u32 [#allocation17], 4
      %s146 = int_to_ptr.vmem [resolvable:$true] %s145
      %148 = dma.hbm_to_vmem [thread:$0]  %s9, 16, %s146, [#allocation18]
    $region41: #{tpu_custom_call.1} parent=1 // pred_fallthru
      _
    // Predicated region
    $region42: #{tpu_custom_call.1} parent=1 // pred_check
      _
    $region43: #{tpu_custom_call.1} parent=1 // pred_check_branch
      %150 = sbr.rel (0) target = $region45
    $region44: #{tpu_custom_call.1} parent=1 // pred_region
      %s152 = ssub.s32 16, 16
      %153 = vsyncadd [#allocation18], %s152
      %s155 = sshll.u32 [#allocation19], 4
      %s156 = int_to_ptr.vmem [resolvable:$true] %s155
      %158 = dma.hbm_to_vmem [thread:$0]  %s10, 16, %s156, [#allocation18]
    $region45: #{tpu_custom_call.1} parent=1 // pred_fallthru
      _
    // Predicated region
    $region46: #{tpu_custom_call.1} parent=1 // pred_check
      _
    $region47: #{tpu_custom_call.1} parent=1 // pred_check_branch
      %160 = sbr.rel (0) target = $region49
    $region48: #{tpu_custom_call.1} parent=1 // pred_region
      %s162 = ssub.s32 1024, 1024
      %163 = vsyncadd [#allocation21], %s162
      %s164 = sshll.u32 [#allocation20], 4
      %s165 = int_to_ptr.vmem [resolvable:$true] %s164
      %170 = dma.hbm_to_vmem [thread:$0]  %s11, 1024, %s165, [#allocation21], 64, 64, 4
    $region49: #{tpu_custom_call.1} parent=1 // pred_fallthru
      _
    // Predicated region
    $region50: #{tpu_custom_call.1} parent=1 // pred_check
      _
    $region51: #{tpu_custom_call.1} parent=1 // pred_check_branch
      %172 = sbr.rel (0) target = $region53
    $region52: #{tpu_custom_call.1} parent=1 // pred_region
      %s174 = ssub.s32 16, 16
      %175 = vsyncadd [#allocation21], %s174
      %s177 = sshll.u32 [#allocation22], 4
      %s178 = int_to_ptr.vmem [resolvable:$true] %s177
      %180 = dma.hbm_to_vmem [thread:$0]  %s12, 16, %s178, [#allocation21]
    $region53: #{tpu_custom_call.1} parent=1 // pred_fallthru
      _
    // Predicated region
    $region54: #{tpu_custom_call.1} parent=1 // pred_check
      _
    $region55: #{tpu_custom_call.1} parent=1 // pred_check_branch
      %182 = sbr.rel (0) target = $region57
    $region56: #{tpu_custom_call.1} parent=1 // pred_region
      %s184 = ssub.s32 16, 16
      %185 = vsyncadd [#allocation24], %s184
      %s187 = sshll.u32 [#allocation23], 4
      %s188 = int_to_ptr.vmem [resolvable:$true] %s187
      %190 = dma.hbm_to_vmem [thread:$0]  %s13, 16, %s188, [#allocation24]
    $region57: #{tpu_custom_call.1} parent=1 // pred_fallthru
      _
    // Predicated region
    $region58: #{tpu_custom_call.1} parent=1 // pred_check
      _
    $region59: #{tpu_custom_call.1} parent=1 // pred_check_branch
      %192 = sbr.rel (0) target = $region61
    $region60: #{tpu_custom_call.1} parent=1 // pred_region
      %s194 = ssub.s32 1024, 1024
      %195 = vsyncadd [#allocation24], %s194
      %s196 = sshll.u32 [#allocation25], 4
      %s197 = int_to_ptr.vmem [resolvable:$true] %s196
      %202 = dma.hbm_to_vmem [thread:$0]  %s14, 1024, %s197, [#allocation24], 64, 64, 4
    $region61: #{tpu_custom_call.1} parent=1 // pred_fallthru
      _
    // Predicated region
    $region62: #{tpu_custom_call.1} parent=1 // pred_check
      _
    $region63: #{tpu_custom_call.1} parent=1 // pred_check_branch
      %204 = sbr.rel (0) target = $region65
    $region64: #{tpu_custom_call.1} parent=1 // pred_region
      %s206 = ssub.s32 16, 16
      %207 = vsyncadd [#allocation27], %s206
      %s209 = sshll.u32 [#allocation26], 4
      %s210 = int_to_ptr.vmem [resolvable:$true] %s209
      %212 = dma.hbm_to_vmem [thread:$0]  %s15, 16, %s210, [#allocation27]
    $region65: #{tpu_custom_call.1} parent=1 // pred_fallthru
      _
    // Predicated region
    $region66: #{tpu_custom_call.1} parent=1 // pred_check
      _
    $region67: #{tpu_custom_call.1} parent=1 // pred_check_branch
      %214 = sbr.rel (0) target = $region69
    $region68: #{tpu_custom_call.1} parent=1 // pred_region
      %s216 = ssub.s32 16, 16
      %217 = vsyncadd [#allocation27], %s216
      %s219 = sshll.u32 [#allocation28], 4
      %s220 = int_to_ptr.vmem [resolvable:$true] %s219
      %222 = dma.hbm_to_vmem [thread:$0]  %s16, 16, %s220, [#allocation27]
    $region69: #{tpu_custom_call.1} parent=1 // pred_fallthru
      _
    // Predicated region
    $region70: #{tpu_custom_call.1} parent=1 // pred_check
      _
    $region71: #{tpu_custom_call.1} parent=1 // pred_check_branch
      %224 = sbr.rel (0) target = $region73
    $region72: #{tpu_custom_call.1} parent=1 // pred_region
      _
    $region73: #{tpu_custom_call.1} parent=1 // pred_fallthru
      _
    // Predicated region
    $region74: #{tpu_custom_call.1} parent=1 // pred_check
      _
    $region75: #{tpu_custom_call.1} parent=1 // pred_check_branch
      %226 = sbr.rel (0) target = $region77
    $region76: #{tpu_custom_call.1} parent=1 // pred_region
      _
    $region77: #{tpu_custom_call.1} parent=1 // pred_fallthru
      _
    // Predicated region
    $region78: #{tpu_custom_call.1} parent=1 // pred_check
      _
    $region79: #{tpu_custom_call.1} parent=1 // pred_check_branch
      %228 = sbr.rel (0) target = $region81
    $region80: #{tpu_custom_call.1} parent=1 // pred_region
      %s230 = ssub.s32 2048, 2048
      %231 = vsyncadd [#allocation30], %s230
      %s232 = sshll.u32 [#allocation29], 4
      %s233 = int_to_ptr.vmem [resolvable:$true] %s232
      %238 = dma.hbm_to_vmem [thread:$0]  %s19, 2048, %s233, [#allocation30], 64, 64, 4
    $region81: #{tpu_custom_call.1} parent=1 // pred_fallthru
      _
    // Predicated region
    $region82: #{tpu_custom_call.1} parent=1 // pred_check
      _
    $region83: #{tpu_custom_call.1} parent=1 // pred_check_branch
      %240 = sbr.rel (0) target = $region85
    $region84: #{tpu_custom_call.1} parent=1 // pred_region
      _
    $region85: #{tpu_custom_call.1} parent=1 // pred_fallthru
      _
    // Predicated region
    $region86: #{tpu_custom_call.1} parent=1 // pred_check
      _
    $region87: #{tpu_custom_call.1} parent=1 // pred_check_branch
      %242 = sbr.rel (0) target = $region89
    $region88: #{tpu_custom_call.1} parent=1 // pred_region
      %243 = dma.done [#allocation3], 128
    $region89: #{tpu_custom_call.1} parent=1 // pred_fallthru
      _
    // Predicated region
    $region90: #{tpu_custom_call.1} parent=1 // pred_check
      _
    $region91: #{tpu_custom_call.1} parent=1 // pred_check_branch
      %245 = sbr.rel (0) target = $region93
    $region92: #{tpu_custom_call.1} parent=1 // pred_region
      %246 = dma.done [#allocation6], 128
    $region93: #{tpu_custom_call.1} parent=1 // pred_fallthru
      _
    // Predicated region
    $region94: #{tpu_custom_call.1} parent=1 // pred_check
      _
    $region95: #{tpu_custom_call.1} parent=1 // pred_check_branch
      %248 = sbr.rel (0) target = $region97
    $region96: #{tpu_custom_call.1} parent=1 // pred_region
      %249 = dma.done [#allocation6], 1024
    $region97: #{tpu_custom_call.1} parent=1 // pred_fallthru
      _
    // Predicated region
    $region98: #{tpu_custom_call.1} parent=1 // pred_check
      _
    $region99: #{tpu_custom_call.1} parent=1 // pred_check_branch
      %251 = sbr.rel (0) target = $region101
    $region100: #{tpu_custom_call.1} parent=1 // pred_region
      %252 = dma.done [#allocation9], 16
    $region101: #{tpu_custom_call.1} parent=1 // pred_fallthru
      _
    // Predicated region
    $region102: #{tpu_custom_call.1} parent=1 // pred_check
      _
    $region103: #{tpu_custom_call.1} parent=1 // pred_check_branch
      %254 = sbr.rel (0) target = $region105
    $region104: #{tpu_custom_call.1} parent=1 // pred_region
      %255 = dma.done [#allocation9], 16
    $region105: #{tpu_custom_call.1} parent=1 // pred_fallthru
      _
    // Predicated region
    $region106: #{tpu_custom_call.1} parent=1 // pred_check
      _
    $region107: #{tpu_custom_call.1} parent=1 // pred_check_branch
      %257 = sbr.rel (0) target = $region109
    $region108: #{tpu_custom_call.1} parent=1 // pred_region
      %258 = dma.done [#allocation12], 1024
    $region109: #{tpu_custom_call.1} parent=1 // pred_fallthru
      _
    // Predicated region
    $region110: #{tpu_custom_call.1} parent=1 // pred_check
      _
    $region111: #{tpu_custom_call.1} parent=1 // pred_check_branch
      %260 = sbr.rel (0) target = $region113
    $region112: #{tpu_custom_call.1} parent=1 // pred_region
      %261 = dma.done [#allocation12], 16
    $region113: #{tpu_custom_call.1} parent=1 // pred_fallthru
      _
    // Predicated region
    $region114: #{tpu_custom_call.1} parent=1 // pred_check
      _
    $region115: #{tpu_custom_call.1} parent=1 // pred_check_branch
      %263 = sbr.rel (0) target = $region117
    $region116: #{tpu_custom_call.1} parent=1 // pred_region
      %264 = dma.done [#allocation15], 16
    $region117: #{tpu_custom_call.1} parent=1 // pred_fallthru
      _
    // Predicated region
    $region118: #{tpu_custom_call.1} parent=1 // pred_check
      _
    $region119: #{tpu_custom_call.1} parent=1 // pred_check_branch
      %266 = sbr.rel (0) target = $region121
    $region120: #{tpu_custom_call.1} parent=1 // pred_region
      %267 = dma.done [#allocation15], 1024
    $region121: #{tpu_custom_call.1} parent=1 // pred_fallthru
      _
    // Predicated region
    $region122: #{tpu_custom_call.1} parent=1 // pred_check
      _
    $region123: #{tpu_custom_call.1} parent=1 // pred_check_branch
      %269 = sbr.rel (0) target = $region125
    $region124: #{tpu_custom_call.1} parent=1 // pred_region
      %270 = dma.done [#allocation18], 16
    $region125: #{tpu_custom_call.1} parent=1 // pred_fallthru
      _
    // Predicated region
    $region126: #{tpu_custom_call.1} parent=1 // pred_check
      _
    $region127: #{tpu_custom_call.1} parent=1 // pred_check_branch
      %272 = sbr.rel (0) target = $region129
    $region128: #{tpu_custom_call.1} parent=1 // pred_region
      %273 = dma.done [#allocation18], 16
    $region129: #{tpu_custom_call.1} parent=1 // pred_fallthru
      _
    // Predicated region
    $region130: #{tpu_custom_call.1} parent=1 // pred_check
      _
    $region131: #{tpu_custom_call.1} parent=1 // pred_check_branch
      %275 = sbr.rel (0) target = $region133
    $region132: #{tpu_custom_call.1} parent=1 // pred_region
      %276 = dma.done [#allocation21], 1024
    $region133: #{tpu_custom_call.1} parent=1 // pred_fallthru
      _
    // Predicated region
    $region134: #{tpu_custom_call.1} parent=1 // pred_check
      _
    $region135: #{tpu_custom_call.1} parent=1 // pred_check_branch
      %278 = sbr.rel (0) target = $region137
    $region136: #{tpu_custom_call.1} parent=1 // pred_region
      %279 = dma.done [#allocation21], 16
    $region137: #{tpu_custom_call.1} parent=1 // pred_fallthru
      _
    // Predicated region
    $region138: #{tpu_custom_call.1} parent=1 // pred_check
      _
    $region139: #{tpu_custom_call.1} parent=1 // pred_check_branch
      %281 = sbr.rel (0) target = $region141
    $region140: #{tpu_custom_call.1} parent=1 // pred_region
      %282 = dma.done [#allocation24], 16
    $region141: #{tpu_custom_call.1} parent=1 // pred_fallthru
      _
    // Predicated region
    $region142: #{tpu_custom_call.1} parent=1 // pred_check
      _
    $region143: #{tpu_custom_call.1} parent=1 // pred_check_branch
      %284 = sbr.rel (0) target = $region145
    $region144: #{tpu_custom_call.1} parent=1 // pred_region
      %285 = dma.done [#allocation24], 1024
    $region145: #{tpu_custom_call.1} parent=1 // pred_fallthru
      _
    // Predicated region
    $region146: #{tpu_custom_call.1} parent=1 // pred_check
      _
    $region147: #{tpu_custom_call.1} parent=1 // pred_check_branch
      %287 = sbr.rel (0) target = $region149
    $region148: #{tpu_custom_call.1} parent=1 // pred_region
      %288 = dma.done [#allocation27], 16
    $region149: #{tpu_custom_call.1} parent=1 // pred_fallthru
      _
    // Predicated region
    $region150: #{tpu_custom_call.1} parent=1 // pred_check
      _
    $region151: #{tpu_custom_call.1} parent=1 // pred_check_branch
      %290 = sbr.rel (0) target = $region153
    $region152: #{tpu_custom_call.1} parent=1 // pred_region
      %291 = dma.done [#allocation27], 16
    $region153: #{tpu_custom_call.1} parent=1 // pred_fallthru
      _
    // Predicated region
    $region154: #{tpu_custom_call.1} parent=1 // pred_check
      _
    $region155: #{tpu_custom_call.1} parent=1 // pred_check_branch
      %293 = sbr.rel (0) target = $region157
    $region156: #{tpu_custom_call.1} parent=1 // pred_region
      %294 = dma.done [#allocation30], 2048
    $region157: #{tpu_custom_call.1} parent=1 // pred_fallthru
      _
    %v296 = vld [vmem:[#allocation2] sm:$0xff]
    %v297 = vpack.c.bf16 %v296, %v296
    %v298 = vld [vmem:[#allocation7] sm:$0xf]
    %v299 = vld [vmem:[#allocation7 + $0x4] sm:$0xf]
    %v300 = vld [vmem:[#allocation7 + $0x8] sm:$0xf]
    %v301 = vld [vmem:[#allocation7 + $0xc] sm:$0xf]
    %v302 = vld [vmem:[#allocation7 + $0x10] sm:$0xf]
    %v303 = vld [vmem:[#allocation7 + $0x14] sm:$0xf]
    %v304 = vld [vmem:[#allocation7 + $0x18] sm:$0xf]
    %v305 = vld [vmem:[#allocation7 + $0x1c] sm:$0xf]
    %v306 = vld [vmem:[#allocation7 + $0x20] sm:$0xf]
    %v307 = vld [vmem:[#allocation7 + $0x24] sm:$0xf]
    %v308 = vld [vmem:[#allocation7 + $0x28] sm:$0xf]
    %v309 = vld [vmem:[#allocation7 + $0x2c] sm:$0xf]
    %v310 = vld [vmem:[#allocation7 + $0x30] sm:$0xf]
    %v311 = vld [vmem:[#allocation7 + $0x34] sm:$0xf]
    %v312 = vld [vmem:[#allocation7 + $0x38] sm:$0xf]
    %v313 = vld [vmem:[#allocation7 + $0x3c] sm:$0xf]
    %v330 = vunpack.c.l.b16 %v298
    %v331 = vunpack.c.l.b16 %v299
    %v332 = vunpack.c.l.b16 %v300
    %v333 = vunpack.c.l.b16 %v301
    %v334 = vunpack.c.l.b16 %v302
    %v335 = vunpack.c.l.b16 %v303
    %v336 = vunpack.c.l.b16 %v304
    %v337 = vunpack.c.l.b16 %v305
    %v338 = vunpack.c.l.b16 %v306
    %v339 = vunpack.c.l.b16 %v307
    %v340 = vunpack.c.l.b16 %v308
    %v341 = vunpack.c.l.b16 %v309
    %v342 = vunpack.c.l.b16 %v310
    %v343 = vunpack.c.l.b16 %v311
    %v344 = vunpack.c.l.b16 %v312
    %v345 = vunpack.c.l.b16 %v313
    %v346 = vpack.c.b16 %v331, %v330
    %v347 = vpack.c.b16 %v333, %v332
    %v348 = vpack.c.b16 %v335, %v334
    %v349 = vpack.c.b16 %v337, %v336
    %v350 = vpack.c.b16 %v339, %v338
    %v351 = vpack.c.b16 %v341, %v340
    %v352 = vpack.c.b16 %v343, %v342
    %v353 = vpack.c.b16 %v345, %v344
    %362 = vmatprep.subr.bf16.mxu0 0
    %363 = vmatpush1.bf16.msra.mxu0 %v346
    %364 = vmatprep.subr.bf16.mxu0 0
    %365 = vmatpush1.bf16.msra.mxu0 %v347
    %366 = vmatprep.subr.bf16.mxu0 0
    %367 = vmatpush1.bf16.msra.mxu0 %v348
    %368 = vmatprep.subr.bf16.mxu0 0
    %369 = vmatpush1.bf16.msra.mxu0 %v349
    %370 = vmatprep.subr.bf16.mxu0 0
    %371 = vmatpush1.bf16.msra.mxu0 %v350
    %372 = vmatprep.subr.bf16.mxu0 0
    %373 = vmatpush1.bf16.msra.mxu0 %v351
    %374 = vmatprep.subr.bf16.mxu0 0
    %375 = vmatpush1.bf16.msra.mxu0 %v352
    %376 = vmatprep.subr.bf16.mxu0 0
    %377 = vmatpush1.bf16.msra.mxu0 %v353
    %378 = vmatprep.subr.bf16.mxu0 0
    %379 = vmatpush1.bf16.msra.mxu0 0
    %380 = vmatprep.subr.bf16.mxu0 0
    %381 = vmatpush1.bf16.msra.mxu0 0
    %382 = vmatprep.subr.bf16.mxu0 0
    %383 = vmatpush1.bf16.msra.mxu0 0
    %384 = vmatprep.subr.bf16.mxu0 0
    %385 = vmatpush1.bf16.msra.mxu0 0
    %386 = vmatprep.subr.bf16.mxu0 0
    %387 = vmatpush1.bf16.msra.mxu0 0
    %388 = vmatprep.subr.bf16.mxu0 0
    %389 = vmatpush1.bf16.msra.mxu0 0
    %390 = vmatprep.subr.bf16.mxu0 0
    %391 = vmatpush1.bf16.msra.mxu0 0
    %392 = vmatprep.subr.bf16.mxu0 0
    %393 = vmatpush1.bf16.msra.mxu0 0
    %394 = vmatprep.mubr.bf16.mxu0 0
    %395 = vmatmul.mubr.bf16.gmra.mrb[0].mxu0 %v297
    %v396 = vpop.f32.mrb[0].mxu0
    %v397 = vadd.f32 0.0, %v396
    %v398 = vpop.f32.mrb[0].mxu0
    %v399 = vpop.f32.mrb[0].mxu0
    %v400 = vpop.f32.mrb[0].mxu0
    %401 = vdwg.mxu0
    %v402 = vrot.slane %v397, 4
    %v403 = vadd.f32 %v397, %v402
    %v404 = vrot.slane %v403, 2
    %v405 = vadd.f32 %v403, %v404
    %v406 = vrot.slane %v405, 1
    %v407 = vadd.f32 %v405, %v406
    %v408 = vmul.f32 %v407, 0.125
    %v409 = vsub.f32 %v397, %v408
    %v410 = vmul.f32 %v409, %v409
    %v411 = vrot.slane %v410, 4
    %v412 = vadd.f32 %v410, %v411
    %v413 = vrot.slane %v412, 2
    %v414 = vadd.f32 %v412, %v413
    %v415 = vrot.slane %v414, 1
    %v416 = vadd.f32 %v414, %v415
    %v417 = vmul.f32 %v416, 0.125
    %v418 = vld [vmem:[#allocation8] sm:$0x1]
    %v419 = vadd.f32 %v417, 1e-05
    %v420 = vrsqrt.pop %v419
    %v421 = vmul.f32 %v418, %v420
    %v422 = vld [vmem:[#allocation10] sm:$0x1]
    %v423 = vmul.f32 %v408, %v421
    %v424 = vsub.f32 %v422, %v423
    %v426 = vlaneseq
    %v427 = vshrl.u32 %v426, 7
    %v428 = vsub.s32 0, %v427
    %v429 = vrot.slane %v421, %v428
    %v431 = vmul.f32 %v397, %v429
    %v433 = vlaneseq
    %v434 = vshrl.u32 %v433, 7
    %v435 = vsub.s32 0, %v434
    %v436 = vrot.slane %v424, %v435
    %v438 = vadd.f32 %v431, %v436
    %v439 = vld [vmem:[#allocation5] sm:$0xff]
    %v440 = vpack.c.bf16 %v439, %v438
    %v441 = vld [vmem:[#allocation11] sm:$0xf]
    %v442 = vld [vmem:[#allocation11 + $0x4] sm:$0xf]
    %v443 = vld [vmem:[#allocation11 + $0x8] sm:$0xf]
    %v444 = vld [vmem:[#allocation11 + $0xc] sm:$0xf]
    %v445 = vld [vmem:[#allocation11 + $0x10] sm:$0xf]
    %v446 = vld [vmem:[#allocation11 + $0x14] sm:$0xf]
    %v447 = vld [vmem:[#allocation11 + $0x18] sm:$0xf]
    %v448 = vld [vmem:[#allocation11 + $0x1c] sm:$0xf]
    %v449 = vld [vmem:[#allocation11 + $0x20] sm:$0xf]
    %v450 = vld [vmem:[#allocation11 + $0x24] sm:$0xf]
    %v451 = vld [vmem:[#allocation11 + $0x28] sm:$0xf]
    %v452 = vld [vmem:[#allocation11 + $0x2c] sm:$0xf]
    %v453 = vld [vmem:[#allocation11 + $0x30] sm:$0xf]
    %v454 = vld [vmem:[#allocation11 + $0x34] sm:$0xf]
    %v455 = vld [vmem:[#allocation11 + $0x38] sm:$0xf]
    %v456 = vld [vmem:[#allocation11 + $0x3c] sm:$0xf]
    %v473 = vunpack.c.l.b16 %v441
    %v474 = vunpack.c.l.b16 %v442
    %v475 = vunpack.c.l.b16 %v443
    %v476 = vunpack.c.l.b16 %v444
    %v477 = vunpack.c.l.b16 %v445
    %v478 = vunpack.c.l.b16 %v446
    %v479 = vunpack.c.l.b16 %v447
    %v480 = vunpack.c.l.b16 %v448
    %v481 = vunpack.c.l.b16 %v449
    %v482 = vunpack.c.l.b16 %v450
    %v483 = vunpack.c.l.b16 %v451
    %v484 = vunpack.c.l.b16 %v452
    %v485 = vunpack.c.l.b16 %v453
    %v486 = vunpack.c.l.b16 %v454
    %v487 = vunpack.c.l.b16 %v455
    %v488 = vunpack.c.l.b16 %v456
    %v489 = vpack.c.b16 %v474, %v473
    %v490 = vpack.c.b16 %v476, %v475
    %v491 = vpack.c.b16 %v478, %v477
    %v492 = vpack.c.b16 %v480, %v479
    %v493 = vpack.c.b16 %v482, %v481
    %v494 = vpack.c.b16 %v484, %v483
    %v495 = vpack.c.b16 %v486, %v485
    %v496 = vpack.c.b16 %v488, %v487
    %505 = vmatprep.subr.bf16.mxu0 0
    %506 = vmatpush1.bf16.msra.mxu0 %v489
    %507 = vmatprep.subr.bf16.mxu0 0
    %508 = vmatpush1.bf16.msra.mxu0 %v490
    %509 = vmatprep.subr.bf16.mxu0 0
    %510 = vmatpush1.bf16.msra.mxu0 %v491
    %511 = vmatprep.subr.bf16.mxu0 0
    %512 = vmatpush1.bf16.msra.mxu0 %v492
    %513 = vmatprep.subr.bf16.mxu0 0
    %514 = vmatpush1.bf16.msra.mxu0 %v493
    %515 = vmatprep.subr.bf16.mxu0 0
    %516 = vmatpush1.bf16.msra.mxu0 %v494
    %517 = vmatprep.subr.bf16.mxu0 0
    %518 = vmatpush1.bf16.msra.mxu0 %v495
    %519 = vmatprep.subr.bf16.mxu0 0
    %520 = vmatpush1.bf16.msra.mxu0 %v496
    %521 = vmatprep.subr.bf16.mxu0 0
    %522 = vmatpush1.bf16.msra.mxu0 0
    %523 = vmatprep.subr.bf16.mxu0 0
    %524 = vmatpush1.bf16.msra.mxu0 0
    %525 = vmatprep.subr.bf16.mxu0 0
    %526 = vmatpush1.bf16.msra.mxu0 0
    %527 = vmatprep.subr.bf16.mxu0 0
    %528 = vmatpush1.bf16.msra.mxu0 0
    %529 = vmatprep.subr.bf16.mxu0 0
    %530 = vmatpush1.bf16.msra.mxu0 0
    %531 = vmatprep.subr.bf16.mxu0 0
    %532 = vmatpush1.bf16.msra.mxu0 0
    %533 = vmatprep.subr.bf16.mxu0 0
    %534 = vmatpush1.bf16.msra.mxu0 0
    %535 = vmatprep.subr.bf16.mxu0 0
    %536 = vmatpush1.bf16.msra.mxu0 0
    %537 = vmatprep.mubr.bf16.mxu0 0
    %538 = vmatmul.mubr.bf16.gmra.mrb[0].mxu0 %v440
    %v539 = vpop.f32.mrb[0].mxu0
    %v540 = vadd.f32 0.0, %v539
    %v541 = vpop.f32.mrb[0].mxu0
    %v542 = vpop.f32.mrb[0].mxu0
    %v543 = vadd.f32 0.0, %v542
    %v544 = vpop.f32.mrb[0].mxu0
    %545 = vdwg.mxu0
    %v546 = vrot.slane %v540, 4
    %v547 = vadd.f32 %v540, %v546
    %v548 = vrot.slane %v547, 2
    %v549 = vadd.f32 %v547, %v548
    %v550 = vrot.slane %v549, 1
    %v551 = vadd.f32 %v549, %v550
    %v552 = vmul.f32 %v551, 0.125
    %v553 = vsub.f32 %v540, %v552
    %v554 = vmul.f32 %v553, %v553
    %v555 = vrot.slane %v554, 4
    %v556 = vadd.f32 %v554, %v555
    %v557 = vrot.slane %v556, 2
    %v558 = vadd.f32 %v556, %v557
    %v559 = vrot.slane %v558, 1
    %v560 = vadd.f32 %v558, %v559
    %v561 = vmul.f32 %v560, 0.125
    %v562 = vld [vmem:[#allocation13] sm:$0x1]
    %v563 = vadd.f32 %v561, 1e-05
    %v564 = vrsqrt.pop %v563
    %v565 = vmul.f32 %v562, %v564
    %v566 = vld [vmem:[#allocation14] sm:$0x1]
    %v567 = vmul.f32 %v552, %v565
    %v568 = vsub.f32 %v566, %v567
    %v570 = vlaneseq
    %v571 = vshrl.u32 %v570, 7
    %v572 = vsub.s32 0, %v571
    %v573 = vrot.slane %v565, %v572
    %v575 = vmul.f32 %v540, %v573
    %v577 = vlaneseq
    %v578 = vshrl.u32 %v577, 7
    %v579 = vsub.s32 0, %v578
    %v580 = vrot.slane %v568, %v579
    %v582 = vadd.f32 %v575, %v580
    %v583 = vrot.slane %v543, 4
    %v584 = vadd.f32 %v543, %v583
    %v585 = vrot.slane %v584, 2
    %v586 = vadd.f32 %v584, %v585
    %v587 = vrot.slane %v586, 1
    %v588 = vadd.f32 %v586, %v587
    %v589 = vmul.f32 %v588, 0.125
    %v590 = vsub.f32 %v543, %v589
    %v591 = vmul.f32 %v590, %v590
    %v592 = vrot.slane %v591, 4
    %v593 = vadd.f32 %v591, %v592
    %v594 = vrot.slane %v593, 2
    %v595 = vadd.f32 %v593, %v594
    %v596 = vrot.slane %v595, 1
    %v597 = vadd.f32 %v595, %v596
    %v598 = vmul.f32 %v597, 0.125
    %v599 = vadd.f32 %v598, 1e-05
    %v600 = vrsqrt.pop %v599
    %v601 = vmul.f32 %v562, %v600
    %v602 = vmul.f32 %v589, %v601
    %v603 = vsub.f32 %v566, %v602
    %v605 = vlaneseq
    %v606 = vshrl.u32 %v605, 7
    %v607 = vsub.s32 0, %v606
    %v608 = vrot.slane %v601, %v607
    %v610 = vmul.f32 %v543, %v608
    %v612 = vlaneseq
    %v613 = vshrl.u32 %v612, 7
    %v614 = vsub.s32 0, %v613
    %v615 = vrot.slane %v603, %v614
    %v617 = vadd.f32 %v610, %v615
    %v618 = vmul.f32 %v582, 0.01
    %v619 = vmul.f32 %v617, 0.01
    %v620 = vmax.f32 %v582, %v618
    %v621 = vmax.f32 %v617, %v619
    %v622 = vpack.c.bf16 %v621, %v620
    %v623 = vld [vmem:[#allocation16] sm:$0xf]
    %v624 = vld [vmem:[#allocation16 + $0x4] sm:$0xf]
    %v625 = vld [vmem:[#allocation16 + $0x8] sm:$0xf]
    %v626 = vld [vmem:[#allocation16 + $0xc] sm:$0xf]
    %v627 = vld [vmem:[#allocation16 + $0x10] sm:$0xf]
    %v628 = vld [vmem:[#allocation16 + $0x14] sm:$0xf]
    %v629 = vld [vmem:[#allocation16 + $0x18] sm:$0xf]
    %v630 = vld [vmem:[#allocation16 + $0x1c] sm:$0xf]
    %v631 = vld [vmem:[#allocation16 + $0x20] sm:$0xf]
    %v632 = vld [vmem:[#allocation16 + $0x24] sm:$0xf]
    %v633 = vld [vmem:[#allocation16 + $0x28] sm:$0xf]
    %v634 = vld [vmem:[#allocation16 + $0x2c] sm:$0xf]
    %v635 = vld [vmem:[#allocation16 + $0x30] sm:$0xf]
    %v636 = vld [vmem:[#allocation16 + $0x34] sm:$0xf]
    %v637 = vld [vmem:[#allocation16 + $0x38] sm:$0xf]
    %v638 = vld [vmem:[#allocation16 + $0x3c] sm:$0xf]
    %v655 = vunpack.c.l.b16 %v623
    %v656 = vunpack.c.l.b16 %v624
    %v657 = vunpack.c.l.b16 %v625
    %v658 = vunpack.c.l.b16 %v626
    %v659 = vunpack.c.l.b16 %v627
    %v660 = vunpack.c.l.b16 %v628
    %v661 = vunpack.c.l.b16 %v629
    %v662 = vunpack.c.l.b16 %v630
    %v663 = vunpack.c.l.b16 %v631
    %v664 = vunpack.c.l.b16 %v632
    %v665 = vunpack.c.l.b16 %v633
    %v666 = vunpack.c.l.b16 %v634
    %v667 = vunpack.c.l.b16 %v635
    %v668 = vunpack.c.l.b16 %v636
    %v669 = vunpack.c.l.b16 %v637
    %v670 = vunpack.c.l.b16 %v638
    %v671 = vpack.c.b16 %v656, %v655
    %v672 = vpack.c.b16 %v658, %v657
    %v673 = vpack.c.b16 %v660, %v659
    %v674 = vpack.c.b16 %v662, %v661
    %v675 = vpack.c.b16 %v664, %v663
    %v676 = vpack.c.b16 %v666, %v665
    %v677 = vpack.c.b16 %v668, %v667
    %v678 = vpack.c.b16 %v670, %v669
    %687 = vmatprep.subr.bf16.mxu0 0
    %688 = vmatpush1.bf16.msra.mxu0 %v671
    %689 = vmatprep.subr.bf16.mxu0 0
    %690 = vmatpush1.bf16.msra.mxu0 %v672
    %691 = vmatprep.subr.bf16.mxu0 0
    %692 = vmatpush1.bf16.msra.mxu0 %v673
    %693 = vmatprep.subr.bf16.mxu0 0
    %694 = vmatpush1.bf16.msra.mxu0 %v674
    %695 = vmatprep.subr.bf16.mxu0 0
    %696 = vmatpush1.bf16.msra.mxu0 %v675
    %697 = vmatprep.subr.bf16.mxu0 0
    %698 = vmatpush1.bf16.msra.mxu0 %v676
    %699 = vmatprep.subr.bf16.mxu0 0
    %700 = vmatpush1.bf16.msra.mxu0 %v677
    %701 = vmatprep.subr.bf16.mxu0 0
    %702 = vmatpush1.bf16.msra.mxu0 %v678
    %703 = vmatprep.subr.bf16.mxu0 0
    %704 = vmatpush1.bf16.msra.mxu0 0
    %705 = vmatprep.subr.bf16.mxu0 0
    %706 = vmatpush1.bf16.msra.mxu0 0
    %707 = vmatprep.subr.bf16.mxu0 0
    %708 = vmatpush1.bf16.msra.mxu0 0
    %709 = vmatprep.subr.bf16.mxu0 0
    %710 = vmatpush1.bf16.msra.mxu0 0
    %711 = vmatprep.subr.bf16.mxu0 0
    %712 = vmatpush1.bf16.msra.mxu0 0
    %713 = vmatprep.subr.bf16.mxu0 0
    %714 = vmatpush1.bf16.msra.mxu0 0
    %715 = vmatprep.subr.bf16.mxu0 0
    %716 = vmatpush1.bf16.msra.mxu0 0
    %717 = vmatprep.subr.bf16.mxu0 0
    %718 = vmatpush1.bf16.msra.mxu0 0
    %719 = vmatprep.mubr.bf16.mxu0 0
    %720 = vmatmul.mubr.bf16.gmra.mrb[0].mxu0 %v622
    %v721 = vpop.f32.mrb[0].mxu0
    %v722 = vadd.f32 0.0, %v721
    %v723 = vpop.f32.mrb[0].mxu0
    %v724 = vpop.f32.mrb[0].mxu0
    %v725 = vadd.f32 0.0, %v724
    %v726 = vpop.f32.mrb[0].mxu0
    %727 = vdwg.mxu0
    %v728 = vrot.slane %v722, 4
    %v729 = vadd.f32 %v722, %v728
    %v730 = vrot.slane %v729, 2
    %v731 = vadd.f32 %v729, %v730
    %v732 = vrot.slane %v731, 1
    %v733 = vadd.f32 %v731, %v732
    %v734 = vmul.f32 %v733, 0.125
    %v735 = vsub.f32 %v722, %v734
    %v736 = vmul.f32 %v735, %v735
    %v737 = vrot.slane %v736, 4
    %v738 = vadd.f32 %v736, %v737
    %v739 = vrot.slane %v738, 2
    %v740 = vadd.f32 %v738, %v739
    %v741 = vrot.slane %v740, 1
    %v742 = vadd.f32 %v740, %v741
    %v743 = vmul.f32 %v742, 0.125
    %v744 = vld [vmem:[#allocation17] sm:$0x1]
    %v745 = vadd.f32 %v743, 1e-05
    %v746 = vrsqrt.pop %v745
    %v747 = vmul.f32 %v744, %v746
    %v748 = vld [vmem:[#allocation19] sm:$0x1]
    %v749 = vmul.f32 %v734, %v747
    %v750 = vsub.f32 %v748, %v749
    %v752 = vlaneseq
    %v753 = vshrl.u32 %v752, 7
    %v754 = vsub.s32 0, %v753
    %v755 = vrot.slane %v747, %v754
    %v757 = vmul.f32 %v722, %v755
    %v759 = vlaneseq
    %v760 = vshrl.u32 %v759, 7
    %v761 = vsub.s32 0, %v760
    %v762 = vrot.slane %v750, %v761
    %v764 = vadd.f32 %v757, %v762
    %v765 = vrot.slane %v725, 4
    %v766 = vadd.f32 %v725, %v765
    %v767 = vrot.slane %v766, 2
    %v768 = vadd.f32 %v766, %v767
    %v769 = vrot.slane %v768, 1
    %v770 = vadd.f32 %v768, %v769
    %v771 = vmul.f32 %v770, 0.125
    %v772 = vsub.f32 %v725, %v771
    %v773 = vmul.f32 %v772, %v772
    %v774 = vrot.slane %v773, 4
    %v775 = vadd.f32 %v773, %v774
    %v776 = vrot.slane %v775, 2
    %v777 = vadd.f32 %v775, %v776
    %v778 = vrot.slane %v777, 1
    %v779 = vadd.f32 %v777, %v778
    %v780 = vmul.f32 %v779, 0.125
    %v781 = vadd.f32 %v780, 1e-05
    %v782 = vrsqrt.pop %v781
    %v783 = vmul.f32 %v744, %v782
    %v784 = vmul.f32 %v771, %v783
    %v785 = vsub.f32 %v748, %v784
    %v787 = vlaneseq
    %v788 = vshrl.u32 %v787, 7
    %v789 = vsub.s32 0, %v788
    %v790 = vrot.slane %v783, %v789
    %v792 = vmul.f32 %v725, %v790
    %v794 = vlaneseq
    %v795 = vshrl.u32 %v794, 7
    %v796 = vsub.s32 0, %v795
    %v797 = vrot.slane %v785, %v796
    %v799 = vadd.f32 %v792, %v797
    %v800 = vmul.f32 %v764, 0.01
    %v801 = vmul.f32 %v799, 0.01
    %v802 = vmax.f32 %v764, %v800
    %v803 = vmax.f32 %v799, %v801
    %804 = vst [vmem:[#allocation31] sm:$0xff] %v802
    %805 = vst [vmem:[#allocation32] sm:$0xff] %v803
    %v806 = vpack.c.bf16 %v802, %v802
    %v807 = vpack.c.bf16 %v803, %v803
    %v808 = vld [vmem:[#allocation20] sm:$0xf]
    %v809 = vld [vmem:[#allocation20 + $0x4] sm:$0xf]
    %v810 = vld [vmem:[#allocation20 + $0x8] sm:$0xf]
    %v811 = vld [vmem:[#allocation20 + $0xc] sm:$0xf]
    %v812 = vld [vmem:[#allocation20 + $0x10] sm:$0xf]
    %v813 = vld [vmem:[#allocation20 + $0x14] sm:$0xf]
    %v814 = vld [vmem:[#allocation20 + $0x18] sm:$0xf]
    %v815 = vld [vmem:[#allocation20 + $0x1c] sm:$0xf]
    %v816 = vld [vmem:[#allocation20 + $0x20] sm:$0xf]
    %v817 = vld [vmem:[#allocation20 + $0x24] sm:$0xf]
    %v818 = vld [vmem:[#allocation20 + $0x28] sm:$0xf]
    %v819 = vld [vmem:[#allocation20 + $0x2c] sm:$0xf]
    %v820 = vld [vmem:[#allocation20 + $0x30] sm:$0xf]
    %v821 = vld [vmem:[#allocation20 + $0x34] sm:$0xf]
    %v822 = vld [vmem:[#allocation20 + $0x38] sm:$0xf]
    %v823 = vld [vmem:[#allocation20 + $0x3c] sm:$0xf]
    %v840 = vunpack.c.l.b16 %v808
    %v841 = vunpack.c.l.b16 %v809
    %v842 = vunpack.c.l.b16 %v810
    %v843 = vunpack.c.l.b16 %v811
    %v844 = vunpack.c.l.b16 %v812
    %v845 = vunpack.c.l.b16 %v813
    %v846 = vunpack.c.l.b16 %v814
    %v847 = vunpack.c.l.b16 %v815
    %v848 = vunpack.c.l.b16 %v816
    %v849 = vunpack.c.l.b16 %v817
    %v850 = vunpack.c.l.b16 %v818
    %v851 = vunpack.c.l.b16 %v819
    %v852 = vunpack.c.l.b16 %v820
    %v853 = vunpack.c.l.b16 %v821
    %v854 = vunpack.c.l.b16 %v822
    %v855 = vunpack.c.l.b16 %v823
    %v856 = vpack.c.b16 %v841, %v840
    %v857 = vpack.c.b16 %v843, %v842
    %v858 = vpack.c.b16 %v845, %v844
    %v859 = vpack.c.b16 %v847, %v846
    %v860 = vpack.c.b16 %v849, %v848
    %v861 = vpack.c.b16 %v851, %v850
    %v862 = vpack.c.b16 %v853, %v852
    %v863 = vpack.c.b16 %v855, %v854
    %872 = vmatprep.subr.bf16.mxu0 0
    %873 = vmatpush1.bf16.msra.mxu0 %v856
    %874 = vmatprep.subr.bf16.mxu0 0
    %875 = vmatpush1.bf16.msra.mxu0 %v857
    %876 = vmatprep.subr.bf16.mxu0 0
    %877 = vmatpush1.bf16.msra.mxu0 %v858
    %878 = vmatprep.subr.bf16.mxu0 0
    %879 = vmatpush1.bf16.msra.mxu0 %v859
    %880 = vmatprep.subr.bf16.mxu0 0
    %881 = vmatpush1.bf16.msra.mxu0 %v860
    %882 = vmatprep.subr.bf16.mxu0 0
    %883 = vmatpush1.bf16.msra.mxu0 %v861
    %884 = vmatprep.subr.bf16.mxu0 0
    %885 = vmatpush1.bf16.msra.mxu0 %v862
    %886 = vmatprep.subr.bf16.mxu0 0
    %887 = vmatpush1.bf16.msra.mxu0 %v863
    %888 = vmatprep.subr.bf16.mxu0 0
    %889 = vmatpush1.bf16.msra.mxu0 0
    %890 = vmatprep.subr.bf16.mxu0 0
    %891 = vmatpush1.bf16.msra.mxu0 0
    %892 = vmatprep.subr.bf16.mxu0 0
    %893 = vmatpush1.bf16.msra.mxu0 0
    %894 = vmatprep.subr.bf16.mxu0 0
    %895 = vmatpush1.bf16.msra.mxu0 0
    %896 = vmatprep.subr.bf16.mxu0 0
    %897 = vmatpush1.bf16.msra.mxu0 0
    %898 = vmatprep.subr.bf16.mxu0 0
    %899 = vmatpush1.bf16.msra.mxu0 0
    %900 = vmatprep.subr.bf16.mxu0 0
    %901 = vmatpush1.bf16.msra.mxu0 0
    %902 = vmatprep.subr.bf16.mxu0 0
    %903 = vmatpush1.bf16.msra.mxu0 0
    %904 = vmatprep.mubr.bf16.mxu0 0
    %905 = vmatmul.mubr.bf16.gmra.mrb[0].mxu0 %v806
    %v906 = vpop.f32.mrb[0].mxu0
    %v907 = vadd.f32 0.0, %v906
    %v908 = vpop.f32.mrb[0].mxu0
    %v909 = vpop.f32.mrb[0].mxu0
    %v910 = vpop.f32.mrb[0].mxu0
    %911 = vdwg.mxu0
    %v912 = vrot.slane %v907, 4
    %v913 = vadd.f32 %v907, %v912
    %v914 = vrot.slane %v913, 2
    %v915 = vadd.f32 %v913, %v914
    %v916 = vrot.slane %v915, 1
    %v917 = vadd.f32 %v915, %v916
    %v918 = vmul.f32 %v917, 0.125
    %v919 = vsub.f32 %v907, %v918
    %v920 = vmul.f32 %v919, %v919
    %v921 = vrot.slane %v920, 4
    %v922 = vadd.f32 %v920, %v921
    %v923 = vrot.slane %v922, 2
    %v924 = vadd.f32 %v922, %v923
    %v925 = vrot.slane %v924, 1
    %v926 = vadd.f32 %v924, %v925
    %v927 = vmul.f32 %v926, 0.125
    %v928 = vld [vmem:[#allocation22] sm:$0x1]
    %v929 = vadd.f32 %v927, 1e-05
    %v930 = vrsqrt.pop %v929
    %v931 = vmul.f32 %v928, %v930
    %v932 = vld [vmem:[#allocation23] sm:$0x1]
    %v933 = vmul.f32 %v918, %v931
    %v934 = vsub.f32 %v932, %v933
    %v936 = vlaneseq
    %v937 = vshrl.u32 %v936, 7
    %v938 = vsub.s32 0, %v937
    %v939 = vrot.slane %v931, %v938
    %v941 = vmul.f32 %v907, %v939
    %v943 = vlaneseq
    %v944 = vshrl.u32 %v943, 7
    %v945 = vsub.s32 0, %v944
    %v946 = vrot.slane %v934, %v945
    %v948 = vadd.f32 %v941, %v946
    %v949 = vmul.f32 %v948, 0.01
    %v950 = vmax.f32 %v948, %v949
    %v951 = vpack.c.bf16 %v950, %v950
    %v952 = vld [vmem:[#allocation25] sm:$0xf]
    %v953 = vld [vmem:[#allocation25 + $0x4] sm:$0xf]
    %v954 = vld [vmem:[#allocation25 + $0x8] sm:$0xf]
    %v955 = vld [vmem:[#allocation25 + $0xc] sm:$0xf]
    %v956 = vld [vmem:[#allocation25 + $0x10] sm:$0xf]
    %v957 = vld [vmem:[#allocation25 + $0x14] sm:$0xf]
    %v958 = vld [vmem:[#allocation25 + $0x18] sm:$0xf]
    %v959 = vld [vmem:[#allocation25 + $0x1c] sm:$0xf]
    %v960 = vld [vmem:[#allocation25 + $0x20] sm:$0xf]
    %v961 = vld [vmem:[#allocation25 + $0x24] sm:$0xf]
    %v962 = vld [vmem:[#allocation25 + $0x28] sm:$0xf]
    %v963 = vld [vmem:[#allocation25 + $0x2c] sm:$0xf]
    %v964 = vld [vmem:[#allocation25 + $0x30] sm:$0xf]
    %v965 = vld [vmem:[#allocation25 + $0x34] sm:$0xf]
    %v966 = vld [vmem:[#allocation25 + $0x38] sm:$0xf]
    %v967 = vld [vmem:[#allocation25 + $0x3c] sm:$0xf]
    %v984 = vunpack.c.l.b16 %v952
    %v985 = vunpack.c.l.b16 %v953
    %v986 = vunpack.c.l.b16 %v954
    %v987 = vunpack.c.l.b16 %v955
    %v988 = vunpack.c.l.b16 %v956
    %v989 = vunpack.c.l.b16 %v957
    %v990 = vunpack.c.l.b16 %v958
    %v991 = vunpack.c.l.b16 %v959
    %v992 = vunpack.c.l.b16 %v960
    %v993 = vunpack.c.l.b16 %v961
    %v994 = vunpack.c.l.b16 %v962
    %v995 = vunpack.c.l.b16 %v963
    %v996 = vunpack.c.l.b16 %v964
    %v997 = vunpack.c.l.b16 %v965
    %v998 = vunpack.c.l.b16 %v966
    %v999 = vunpack.c.l.b16 %v967
    %v1000 = vpack.c.b16 %v985, %v984
    %v1001 = vpack.c.b16 %v987, %v986
    %v1002 = vpack.c.b16 %v989, %v988
    %v1003 = vpack.c.b16 %v991, %v990
    %v1004 = vpack.c.b16 %v993, %v992
    %v1005 = vpack.c.b16 %v995, %v994
    %v1006 = vpack.c.b16 %v997, %v996
    %v1007 = vpack.c.b16 %v999, %v998
    %1016 = vmatprep.subr.bf16.mxu0 0
    %1017 = vmatpush1.bf16.msra.mxu0 %v1000
    %1018 = vmatprep.subr.bf16.mxu0 0
    %1019 = vmatpush1.bf16.msra.mxu0 %v1001
    %1020 = vmatprep.subr.bf16.mxu0 0
    %1021 = vmatpush1.bf16.msra.mxu0 %v1002
    %1022 = vmatprep.subr.bf16.mxu0 0
    %1023 = vmatpush1.bf16.msra.mxu0 %v1003
    %1024 = vmatprep.subr.bf16.mxu0 0
    %1025 = vmatpush1.bf16.msra.mxu0 %v1004
    %1026 = vmatprep.subr.bf16.mxu0 0
    %1027 = vmatpush1.bf16.msra.mxu0 %v1005
    %1028 = vmatprep.subr.bf16.mxu0 0
    %1029 = vmatpush1.bf16.msra.mxu0 %v1006
    %1030 = vmatprep.subr.bf16.mxu0 0
    %1031 = vmatpush1.bf16.msra.mxu0 %v1007
    %1032 = vmatprep.subr.bf16.mxu0 0
    %1033 = vmatpush1.bf16.msra.mxu0 0
    %1034 = vmatprep.subr.bf16.mxu0 0
    %1035 = vmatpush1.bf16.msra.mxu0 0
    %1036 = vmatprep.subr.bf16.mxu0 0
    %1037 = vmatpush1.bf16.msra.mxu0 0
    %1038 = vmatprep.subr.bf16.mxu0 0
    %1039 = vmatpush1.bf16.msra.mxu0 0
    %1040 = vmatprep.subr.bf16.mxu0 0
    %1041 = vmatpush1.bf16.msra.mxu0 0
    %1042 = vmatprep.subr.bf16.mxu0 0
    %1043 = vmatpush1.bf16.msra.mxu0 0
    %1044 = vmatprep.subr.bf16.mxu0 0
    %1045 = vmatpush1.bf16.msra.mxu0 0
    %1046 = vmatprep.subr.bf16.mxu0 0
    %1047 = vmatpush1.bf16.msra.mxu0 0
    %1048 = vmatprep.mubr.bf16.mxu0 0
    %1049 = vmatmul.mubr.bf16.gmra.mrb[0].mxu0 %v951
    %v1050 = vpop.f32.mrb[0].mxu0
    %v1051 = vadd.f32 0.0, %v1050
    %v1052 = vpop.f32.mrb[0].mxu0
    %v1053 = vpop.f32.mrb[0].mxu0
    %v1054 = vpop.f32.mrb[0].mxu0
    %1055 = vdwg.mxu0
    %v1056 = vrot.slane %v1051, 4
    %v1057 = vadd.f32 %v1051, %v1056
    %v1058 = vrot.slane %v1057, 2
    %v1059 = vadd.f32 %v1057, %v1058
    %v1060 = vrot.slane %v1059, 1
    %v1061 = vadd.f32 %v1059, %v1060
    %v1062 = vmul.f32 %v1061, 0.125
    %v1063 = vsub.f32 %v1051, %v1062
    %v1064 = vmul.f32 %v1063, %v1063
    %v1065 = vrot.slane %v1064, 4
    %v1066 = vadd.f32 %v1064, %v1065
    %v1067 = vrot.slane %v1066, 2
    %v1068 = vadd.f32 %v1066, %v1067
    %v1069 = vrot.slane %v1068, 1
    %v1070 = vadd.f32 %v1068, %v1069
    %v1071 = vmul.f32 %v1070, 0.125
    %v1072 = vld [vmem:[#allocation26] sm:$0x1]
    %v1073 = vadd.f32 %v1071, 1e-05
    %v1074 = vrsqrt.pop %v1073
    %v1075 = vmul.f32 %v1072, %v1074
    %v1076 = vld [vmem:[#allocation28] sm:$0x1]
    %v1077 = vmul.f32 %v1062, %v1075
    %v1078 = vsub.f32 %v1076, %v1077
    %v1080 = vlaneseq
    %v1081 = vshrl.u32 %v1080, 7
    %v1082 = vsub.s32 0, %v1081
    %v1083 = vrot.slane %v1075, %v1082
    %v1085 = vmul.f32 %v1051, %v1083
    %v1087 = vlaneseq
    %v1088 = vshrl.u32 %v1087, 7
    %v1089 = vsub.s32 0, %v1088
    %v1090 = vrot.slane %v1078, %v1089
    %v1092 = vadd.f32 %v1085, %v1090
    %v1093 = vmul.f32 %v1092, 0.01
    %v1094 = vmax.f32 %v1092, %v1093
    %v1095 = vpack.c.bf16 %v1094, %v1094
    %v1096 = vld [vmem:[%s17] sm:$0xf]
    %v1097 = vld [vmem:[%s17 + $0x4] sm:$0xf]
    %v1098 = vld [vmem:[%s17 + $0x8] sm:$0xf]
    %v1099 = vld [vmem:[%s17 + $0xc] sm:$0xf]
    %v1100 = vld [vmem:[%s17 + $0x10] sm:$0xf]
    %v1101 = vld [vmem:[%s17 + $0x14] sm:$0xf]
    %v1102 = vld [vmem:[%s17 + $0x18] sm:$0xf]
    %v1103 = vld [vmem:[%s17 + $0x1c] sm:$0xf]
    %v1104 = vld [vmem:[%s17 + $0x20] sm:$0xf]
    %v1105 = vld [vmem:[%s17 + $0x24] sm:$0xf]
    %v1106 = vld [vmem:[%s17 + $0x28] sm:$0xf]
    %v1107 = vld [vmem:[%s17 + $0x2c] sm:$0xf]
    %v1108 = vld [vmem:[%s17 + $0x30] sm:$0xf]
    %v1109 = vld [vmem:[%s17 + $0x34] sm:$0xf]
    %v1110 = vld [vmem:[%s17 + $0x38] sm:$0xf]
    %v1111 = vld [vmem:[%s17 + $0x3c] sm:$0xf]
    %v1112 = vld [vmem:[%s18] sm:$0x1]
    %v1114 = vlaneseq
    %v1115 = vshrl.u32 %v1114, 7
    %v1116 = vsub.s32 0, %v1115
    %v1117 = vrot.slane %v1112, %v1116
    %v1135 = vunpack.c.l.b16 %v1096
    %v1136 = vunpack.c.l.b16 %v1097
    %v1137 = vunpack.c.l.b16 %v1098
    %v1138 = vunpack.c.l.b16 %v1099
    %v1139 = vunpack.c.l.b16 %v1100
    %v1140 = vunpack.c.l.b16 %v1101
    %v1141 = vunpack.c.l.b16 %v1102
    %v1142 = vunpack.c.l.b16 %v1103
    %v1143 = vunpack.c.l.b16 %v1104
    %v1144 = vunpack.c.l.b16 %v1105
    %v1145 = vunpack.c.l.b16 %v1106
    %v1146 = vunpack.c.l.b16 %v1107
    %v1147 = vunpack.c.l.b16 %v1108
    %v1148 = vunpack.c.l.b16 %v1109
    %v1149 = vunpack.c.l.b16 %v1110
    %v1150 = vunpack.c.l.b16 %v1111
    %v1151 = vpack.c.b16 %v1136, %v1135
    %v1152 = vpack.c.b16 %v1138, %v1137
    %v1153 = vpack.c.b16 %v1140, %v1139
    %v1154 = vpack.c.b16 %v1142, %v1141
    %v1155 = vpack.c.b16 %v1144, %v1143
    %v1156 = vpack.c.b16 %v1146, %v1145
    %v1157 = vpack.c.b16 %v1148, %v1147
    %v1158 = vpack.c.b16 %v1150, %v1149
    %1167 = vmatprep.subr.bf16.mxu0 0
    %1168 = vmatpush1.bf16.msra.mxu0 %v1151
    %1169 = vmatprep.subr.bf16.mxu0 0
    %1170 = vmatpush1.bf16.msra.mxu0 %v1152
    %1171 = vmatprep.subr.bf16.mxu0 0
    %1172 = vmatpush1.bf16.msra.mxu0 %v1153
    %1173 = vmatprep.subr.bf16.mxu0 0
    %1174 = vmatpush1.bf16.msra.mxu0 %v1154
    %1175 = vmatprep.subr.bf16.mxu0 0
    %1176 = vmatpush1.bf16.msra.mxu0 %v1155
    %1177 = vmatprep.subr.bf16.mxu0 0
    %1178 = vmatpush1.bf16.msra.mxu0 %v1156
    %1179 = vmatprep.subr.bf16.mxu0 0
    %1180 = vmatpush1.bf16.msra.mxu0 %v1157
    %1181 = vmatprep.subr.bf16.mxu0 0
    %1182 = vmatpush1.bf16.msra.mxu0 %v1158
    %1183 = vmatprep.subr.bf16.mxu0 0
    %1184 = vmatpush1.bf16.msra.mxu0 0
    %1185 = vmatprep.subr.bf16.mxu0 0
    %1186 = vmatpush1.bf16.msra.mxu0 0
    %1187 = vmatprep.subr.bf16.mxu0 0
    %1188 = vmatpush1.bf16.msra.mxu0 0
    %1189 = vmatprep.subr.bf16.mxu0 0
    %1190 = vmatpush1.bf16.msra.mxu0 0
    %1191 = vmatprep.subr.bf16.mxu0 0
    %1192 = vmatpush1.bf16.msra.mxu0 0
    %1193 = vmatprep.subr.bf16.mxu0 0
    %1194 = vmatpush1.bf16.msra.mxu0 0
    %1195 = vmatprep.subr.bf16.mxu0 0
    %1196 = vmatpush1.bf16.msra.mxu0 0
    %1197 = vmatprep.subr.bf16.mxu0 0
    %1198 = vmatpush1.bf16.msra.mxu0 0
    %1199 = vmatprep.mubr.bf16.mxu0 0
    %1200 = vmatmul.mubr.bf16.gmra.mrb[0].mxu0 %v1095
    %v1201 = vpop.f32.mrb[0].mxu0
    %v1202 = vadd.f32 %v1117, %v1201
    %v1203 = vpop.f32.mrb[0].mxu0
    %v1204 = vpop.f32.mrb[0].mxu0
    %v1205 = vpop.f32.mrb[0].mxu0
    %1206 = vdwg.mxu0
    %1207 = vst [vmem:[#allocation35] sm:$0xff] %v1202
    %v1208 = vld [vmem:[#allocation29] sm:$0xf]
    %v1209 = vld [vmem:[#allocation29 + $0x4] sm:$0xf]
    %v1210 = vld [vmem:[#allocation29 + $0x8] sm:$0xf]
    %v1211 = vld [vmem:[#allocation29 + $0xc] sm:$0xf]
    %v1212 = vld [vmem:[#allocation29 + $0x10] sm:$0xf]
    %v1213 = vld [vmem:[#allocation29 + $0x14] sm:$0xf]
    %v1214 = vld [vmem:[#allocation29 + $0x18] sm:$0xf]
    %v1215 = vld [vmem:[#allocation29 + $0x1c] sm:$0xf]
    %v1216 = vld [vmem:[#allocation29 + $0x20] sm:$0xf]
    %v1217 = vld [vmem:[#allocation29 + $0x24] sm:$0xf]
    %v1218 = vld [vmem:[#allocation29 + $0x28] sm:$0xf]
    %v1219 = vld [vmem:[#allocation29 + $0x2c] sm:$0xf]
    %v1220 = vld [vmem:[#allocation29 + $0x30] sm:$0xf]
    %v1221 = vld [vmem:[#allocation29 + $0x34] sm:$0xf]
    %v1222 = vld [vmem:[#allocation29 + $0x38] sm:$0xf]
    %v1223 = vld [vmem:[#allocation29 + $0x3c] sm:$0xf]
    %v1224 = vld [vmem:[#allocation29 + $0x40] sm:$0xf]
    %v1225 = vld [vmem:[#allocation29 + $0x44] sm:$0xf]
    %v1226 = vld [vmem:[#allocation29 + $0x48] sm:$0xf]
    %v1227 = vld [vmem:[#allocation29 + $0x4c] sm:$0xf]
    %v1228 = vld [vmem:[#allocation29 + $0x50] sm:$0xf]
    %v1229 = vld [vmem:[#allocation29 + $0x54] sm:$0xf]
    %v1230 = vld [vmem:[#allocation29 + $0x58] sm:$0xf]
    %v1231 = vld [vmem:[#allocation29 + $0x5c] sm:$0xf]
    %v1232 = vld [vmem:[#allocation29 + $0x60] sm:$0xf]
    %v1233 = vld [vmem:[#allocation29 + $0x64] sm:$0xf]
    %v1234 = vld [vmem:[#allocation29 + $0x68] sm:$0xf]
    %v1235 = vld [vmem:[#allocation29 + $0x6c] sm:$0xf]
    %v1236 = vld [vmem:[#allocation29 + $0x70] sm:$0xf]
    %v1237 = vld [vmem:[#allocation29 + $0x74] sm:$0xf]
    %v1238 = vld [vmem:[#allocation29 + $0x78] sm:$0xf]
    %v1239 = vld [vmem:[#allocation29 + $0x7c] sm:$0xf]
    %v1240 = vld [vmem:[%s20] sm:$0x1]
    %v1242 = vlaneseq
    %v1243 = vshrl.u32 %v1242, 7
    %v1244 = vsub.s32 0, %v1243
    %v1245 = vrot.slane %v1240, %v1244
    %v1279 = vunpack.c.l.b16 %v1208
    %v1280 = vunpack.c.l.b16 %v1209
    %v1281 = vunpack.c.l.b16 %v1210
    %v1282 = vunpack.c.l.b16 %v1211
    %v1283 = vunpack.c.l.b16 %v1212
    %v1284 = vunpack.c.l.b16 %v1213
    %v1285 = vunpack.c.l.b16 %v1214
    %v1286 = vunpack.c.l.b16 %v1215
    %v1287 = vunpack.c.l.b16 %v1216
    %v1288 = vunpack.c.l.b16 %v1217
    %v1289 = vunpack.c.l.b16 %v1218
    %v1290 = vunpack.c.l.b16 %v1219
    %v1291 = vunpack.c.l.b16 %v1220
    %v1292 = vunpack.c.l.b16 %v1221
    %v1293 = vunpack.c.l.b16 %v1222
    %v1294 = vunpack.c.l.b16 %v1223
    %v1295 = vunpack.c.l.b16 %v1224
    %v1296 = vunpack.c.l.b16 %v1225
    %v1297 = vunpack.c.l.b16 %v1226
    %v1298 = vunpack.c.l.b16 %v1227
    %v1299 = vunpack.c.l.b16 %v1228
    %v1300 = vunpack.c.l.b16 %v1229
    %v1301 = vunpack.c.l.b16 %v1230
    %v1302 = vunpack.c.l.b16 %v1231
    %v1303 = vunpack.c.l.b16 %v1232
    %v1304 = vunpack.c.l.b16 %v1233
    %v1305 = vunpack.c.l.b16 %v1234
    %v1306 = vunpack.c.l.b16 %v1235
    %v1307 = vunpack.c.l.b16 %v1236
    %v1308 = vunpack.c.l.b16 %v1237
    %v1309 = vunpack.c.l.b16 %v1238
    %v1310 = vunpack.c.l.b16 %v1239
    %v1311 = vpack.c.b16 %v1280, %v1279
    %v1312 = vpack.c.b16 %v1282, %v1281
    %v1313 = vpack.c.b16 %v1284, %v1283
    %v1314 = vpack.c.b16 %v1286, %v1285
    %v1315 = vpack.c.b16 %v1288, %v1287
    %v1316 = vpack.c.b16 %v1290, %v1289
    %v1317 = vpack.c.b16 %v1292, %v1291
    %v1318 = vpack.c.b16 %v1294, %v1293
    %v1319 = vpack.c.b16 %v1296, %v1295
    %v1320 = vpack.c.b16 %v1298, %v1297
    %v1321 = vpack.c.b16 %v1300, %v1299
    %v1322 = vpack.c.b16 %v1302, %v1301
    %v1323 = vpack.c.b16 %v1304, %v1303
    %v1324 = vpack.c.b16 %v1306, %v1305
    %v1325 = vpack.c.b16 %v1308, %v1307
    %v1326 = vpack.c.b16 %v1310, %v1309
    %1343 = vmatprep.subr.bf16.mxu0 0
    %1344 = vmatpush1.bf16.msra.mxu0 %v1311
    %1345 = vmatprep.subr.bf16.mxu0 0
    %1346 = vmatpush1.bf16.msra.mxu0 %v1312
    %1347 = vmatprep.subr.bf16.mxu0 0
    %1348 = vmatpush1.bf16.msra.mxu0 %v1313
    %1349 = vmatprep.subr.bf16.mxu0 0
    %1350 = vmatpush1.bf16.msra.mxu0 %v1314
    %1351 = vmatprep.subr.bf16.mxu0 0
    %1352 = vmatpush1.bf16.msra.mxu0 %v1315
    %1353 = vmatprep.subr.bf16.mxu0 0
    %1354 = vmatpush1.bf16.msra.mxu0 %v1316
    %1355 = vmatprep.subr.bf16.mxu0 0
    %1356 = vmatpush1.bf16.msra.mxu0 %v1317
    %1357 = vmatprep.subr.bf16.mxu0 0
    %1358 = vmatpush1.bf16.msra.mxu0 %v1318
    %1359 = vmatprep.subr.bf16.mxu0 0
    %1360 = vmatpush1.bf16.msra.mxu0 %v1319
    %1361 = vmatprep.subr.bf16.mxu0 0
    %1362 = vmatpush1.bf16.msra.mxu0 %v1320
    %1363 = vmatprep.subr.bf16.mxu0 0
    %1364 = vmatpush1.bf16.msra.mxu0 %v1321
    %1365 = vmatprep.subr.bf16.mxu0 0
    %1366 = vmatpush1.bf16.msra.mxu0 %v1322
    %1367 = vmatprep.subr.bf16.mxu0 0
    %1368 = vmatpush1.bf16.msra.mxu0 %v1323
    %1369 = vmatprep.subr.bf16.mxu0 0
    %1370 = vmatpush1.bf16.msra.mxu0 %v1324
    %1371 = vmatprep.subr.bf16.mxu0 0
    %1372 = vmatpush1.bf16.msra.mxu0 %v1325
    %1373 = vmatprep.subr.bf16.mxu0 0
    %1374 = vmatpush1.bf16.msra.mxu0 %v1326
    %1375 = vmatprep.mubr.bf16.mxu0 %v807
    %1376 = vmatmul.mubr.bf16.gmra.mrb[0].mxu0 %v806
    %v1377 = vpop.f32.mrb[0].mxu0
    %v1378 = vadd.f32 %v1245, %v1377
    %v1379 = vpop.f32.mrb[0].mxu0
    %v1380 = vpop.f32.mrb[0].mxu0
    %v1381 = vpop.f32.mrb[0].mxu0
    %1382 = vdwg.mxu0
    %1383 = vst [vmem:[#allocation34] sm:$0xff] %v1378
    // Predicated region
    $region158: #{tpu_custom_call.1} parent=1 // pred_check
      _
    $region159: #{tpu_custom_call.1} parent=1 // pred_check_branch
      %1385 = sbr.rel (0) target = $region161
    $region160: #{tpu_custom_call.1} parent=1 // pred_region
      %s1387 = ssub.s32 128, 128
      %1388 = vsyncadd [#allocation4], %s1387
      %s1390 = sshll.u32 [#allocation31], 4
      %s1391 = int_to_ptr.vmem [resolvable:$true] %s1390
      %1393 = dma.vmem_to_hbm [thread:$0]  %s1391, 128, %s21, [#allocation4]
    $region161: #{tpu_custom_call.1} parent=1 // pred_fallthru
      _
    // Predicated region
    $region162: #{tpu_custom_call.1} parent=1 // pred_check
      _
    $region163: #{tpu_custom_call.1} parent=1 // pred_check_branch
      %1395 = sbr.rel (0) target = $region165
    $region164: #{tpu_custom_call.1} parent=1 // pred_region
      %s1397 = ssub.s32 128, 128
      %1398 = vsyncadd [#allocation33], %s1397
      %s1400 = sshll.u32 [#allocation32], 4
      %s1401 = int_to_ptr.vmem [resolvable:$true] %s1400
      %1403 = dma.vmem_to_hbm [thread:$0]  %s1401, 128, %s22, [#allocation33]
    $region165: #{tpu_custom_call.1} parent=1 // pred_fallthru
      _
    // Predicated region
    $region166: #{tpu_custom_call.1} parent=1 // pred_check
      _
    $region167: #{tpu_custom_call.1} parent=1 // pred_check_branch
      %1405 = sbr.rel (0) target = $region169
    $region168: #{tpu_custom_call.1} parent=1 // pred_region
      %s1407 = ssub.s32 128, 128
      %1408 = vsyncadd [#allocation33], %s1407
      %s1410 = sshll.u32 [#allocation34], 4
      %s1411 = int_to_ptr.vmem [resolvable:$true] %s1410
      %1413 = dma.vmem_to_hbm [thread:$0]  %s1411, 128, %s23, [#allocation33]
    $region169: #{tpu_custom_call.1} parent=1 // pred_fallthru
      _
    // Predicated region
    $region170: #{tpu_custom_call.1} parent=1 // pred_check
      _
    $region171: #{tpu_custom_call.1} parent=1 // pred_check_branch
      %1415 = sbr.rel (0) target = $region173
    $region172: #{tpu_custom_call.1} parent=1 // pred_region
      %s1417 = ssub.s32 128, 128
      %1418 = vsyncadd [#allocation36], %s1417
      %s1420 = sshll.u32 [#allocation35], 4
      %s1421 = int_to_ptr.vmem [resolvable:$true] %s1420
      %1423 = dma.vmem_to_hbm [thread:$0]  %s1421, 128, %s24, [#allocation36]
    $region173: #{tpu_custom_call.1} parent=1 // pred_fallthru
      _
    // Predicated region
    $region174: #{tpu_custom_call.1} parent=1 // pred_check
      _
    $region175: #{tpu_custom_call.1} parent=1 // pred_check_branch
      %1425 = sbr.rel (0) target = $region177
    $region176: #{tpu_custom_call.1} parent=1 // pred_region
      %1426 = dma.done [#allocation4], 128
    $region177: #{tpu_custom_call.1} parent=1 // pred_fallthru
      _
    // Predicated region
    $region178: #{tpu_custom_call.1} parent=1 // pred_check
      _
    $region179: #{tpu_custom_call.1} parent=1 // pred_check_branch
      %1428 = sbr.rel (0) target = $region181
    $region180: #{tpu_custom_call.1} parent=1 // pred_region
      %1429 = dma.done [#allocation33], 128
    $region181: #{tpu_custom_call.1} parent=1 // pred_fallthru
      _
    // Predicated region
    $region182: #{tpu_custom_call.1} parent=1 // pred_check
      _
    $region183: #{tpu_custom_call.1} parent=1 // pred_check_branch
      %1431 = sbr.rel (0) target = $region185
    $region184: #{tpu_custom_call.1} parent=1 // pred_region
      %1432 = dma.done [#allocation33], 128
    $region185: #{tpu_custom_call.1} parent=1 // pred_fallthru
      _
    // Predicated region
    $region186: #{tpu_custom_call.1} parent=1 // pred_check
      _
    $region187: #{tpu_custom_call.1} parent=1 // pred_check_branch
      %1434 = sbr.rel (0) target = $region189
    $region188: #{tpu_custom_call.1} parent=1 // pred_region
      %1435 = dma.done [#allocation36], 128
    $region189: #{tpu_custom_call.1} parent=1 // pred_fallthru
      _
    %1436 = vsyncpa [#allocation3], 1
    %1437 = vsyncpa [#allocation6], 1
    %1438 = vsyncpa [#allocation9], 1
    %1439 = vsyncpa [#allocation12], 1
    %1440 = vsyncpa [#allocation15], 1
    %1441 = vsyncpa [#allocation18], 1
    %1442 = vsyncpa [#allocation21], 1
    %1443 = vsyncpa [#allocation24], 1
    %1444 = vsyncpa [#allocation27], 1
    %1445 = vsyncpa [#allocation30], 1
    %1446 = vsyncpa [#allocation4], 1
    %1447 = vsyncpa [#allocation33], 1
    %1448 = vsyncpa [#allocation36], 1

</llo_original>
